<compile_context>
chip_gen: v6e
topology: v6e:2x2x1
jax: 0.10.0
libtpu: 0.0.40
codegen_flags: <defaults>
</compile_context>

<pallas_src>
import jax
import jax.numpy as jnp
from jax.experimental import pallas as pl
from jax.experimental.pallas import tpu as pltpu

_LANES = 128
_SUBLANES = 8


def _round_up(x, m):
    return ((x + m - 1) // m) * m


def _fnn_kernel(x_ref,
                w1_ref, b1_ref, w2_ref, b2_ref, w3_ref, b3_ref,
                w4_ref, b4_ref, w5_ref, b5_ref, w6_ref, b6_ref,
                w7_ref, b7_ref,
                out_ref):
    """One batch tile of the fused 7-layer MLP.

    Weights are bf16 and stay VMEM-resident (constant index maps). Activations
    are kept in f32 between layers and cast to bf16 only at each MXU dot.
    """
    def dense(h, w_ref, b_ref, relu=True):
        z = jnp.dot(h.astype(jnp.bfloat16), w_ref[...],
                    preferred_element_type=jnp.float32) + b_ref[...]
        return jnp.maximum(z, 0.0) if relu else z

    h = x_ref[...]                        # (bt, 128) bf16, zero-padded features
    h = dense(h, w1_ref, b1_ref)          # Linear(F ->512) + ReLU
    # TODO(synk): Dropout(p=0.2) treated as identity (inference / eval mode).
    h = dense(h, w2_ref, b2_ref)          # Linear(512->256) + ReLU
    h = dense(h, w3_ref, b3_ref)          # Linear(256->128) + ReLU
    # Dropout(p=0.2): identity in eval mode.
    h = dense(h, w4_ref, b4_ref)          # Linear(128-> 64) + ReLU (padded to 128)
    h = dense(h, w5_ref, b5_ref)          # Linear( 64-> 32) + ReLU (padded to 128)
    h = dense(h, w6_ref, b6_ref)          # Linear( 32-> 16) + ReLU (padded to 128)
    z = dense(h, w7_ref, b7_ref, relu=False)   # Linear(16->1), padded to 128

    # Lane-major writeback: only column 0 is real. XLU transpose + (1,bt) slab
    # keeps the store lane-dense and shrinks output HBM traffic ~128x.
    bt = z.shape[0]
    out_ref[...] = z.T[0:1, :].reshape(1, 1, bt)


def house_price_fnn(x, params, *, block_b=1024):
    """Fused forward pass of HousePriceFNN.

    `params` is a list of 7 (w, b) pairs with w shaped (in_features,
    out_features) (PyTorch weight transposed) and b shaped (out_features,).
    """
    B, F = x.shape
    if F > _LANES:
        raise ValueError("feature-dim padding assumes input_size <= 128")

    # ---- batch tiling ------------------------------------------------------
    B8 = _round_up(B, _SUBLANES)
    n_tiles = pl.cdiv(B8, block_b)
    if B8 >= 2 * _SUBLANES:
        n_tiles = max(n_tiles, 2)          # >=2 steps -> both v7x TensorCores
    bt = _round_up(pl.cdiv(B8, n_tiles), _SUBLANES)
    grid_n = pl.cdiv(B8, bt)
    B_pad = bt * grid_n

    # ---- input: pad features to 128 lanes, batch to B_pad, cast to bf16 ----
    x = x.astype(jnp.float32)
    x = jnp.pad(x, ((0, B_pad - B), (0, _LANES - F))).astype(jnp.bfloat16)

    # ---- params: pad all sub-128 in/out dims to 128, weights -> bf16 -------
    ws, bs = [], []
    for w, b in params:
        din, dout = w.shape
        din_p = din if din >= _LANES else _LANES
        dout_p = dout if dout >= _LANES else _LANES
        w = jnp.pad(w.astype(jnp.float32),
                    ((0, din_p - din), (0, dout_p - dout)))
        b = jnp.pad(b.astype(jnp.float32), (0, dout_p - dout)).reshape(1, -1)
        ws.append(w.astype(jnp.bfloat16))
        bs.append(b)                       # biases stay f32 (f32 VPU add/ReLU)

    flat = []
    for w, b in zip(ws, bs):
        flat += [w, b]

    out = pl.pallas_call(
        _fnn_kernel,
        out_shape=jax.ShapeDtypeStruct((grid_n, 1, bt), jnp.float32),
        grid_spec=pltpu.PrefetchScalarGridSpec(
            num_scalar_prefetch=0,
            grid=(grid_n,),
            in_specs=[pl.BlockSpec((bt, _LANES), lambda i: (i, 0))]
                     + [pl.BlockSpec(a.shape, lambda i: (0, 0)) for a in flat],
            out_specs=pl.BlockSpec((1, 1, bt), lambda i: (i, 0, 0)),
        ),
        compiler_params=pltpu.CompilerParams(
            dimension_semantics=("parallel",),
            vmem_limit_bytes=32 * 1024 * 1024,
        ),
    )(x, *flat)
    return out.reshape(-1)[:B].reshape(B, 1)


def _ref_forward(x, params):
    """Pure-JAX reference with the same dtype policy as the kernel
    (bf16 inputs to each matmul, f32 accumulation, f32 bias/ReLU)."""
    h = x.astype(jnp.float32)
    n = len(params)
    for i, (w, b) in enumerate(params):
        z = jnp.dot(h.astype(jnp.bfloat16), w.astype(jnp.bfloat16),
                    preferred_element_type=jnp.float32) + b
        h = jnp.maximum(z, 0.0) if i < n - 1 else z
    return h


if __name__ == "__main__":
    key = jax.random.PRNGKey(0)
    batch, input_size = 16, 32
    dims = [input_size, 512, 256, 128, 64, 32, 16, 1]

    k_x, kp = jax.random.split(key)
    x = jax.random.normal(k_x, (batch, input_size), dtype=jnp.float32)

    params = []
    for din, dout in zip(dims[:-1], dims[1:]):
        kp, kw, kb = jax.random.split(kp, 3)
        w = jax.random.normal(kw, (din, dout), dtype=jnp.float32) / jnp.sqrt(din)
        b = jax.random.normal(kb, (dout,), dtype=jnp.float32) * 0.1
        params.append((w, b))

    out = house_price_fnn(x, params)
    out = jax.block_until_ready(out)

    ref = _ref_forward(x, params)
    assert out.shape == (batch, 1), out.shape
    assert jnp.allclose(out, ref, rtol=1e-3, atol=1e-3), (out[:4], ref[:4])

    print("KERNEL_OK")
</pallas_src>

<mosaic_0001>
module attributes {stable_mosaic.version = 11 : i64} {
  func.func @_fnn_kernel(%arg0: i32, %arg1: memref<8x128xbf16, #tpu.memory_space<vmem>>, %arg2: memref<128x512xbf16, #tpu.memory_space<vmem>>, %arg3: memref<1x512xf32, #tpu.memory_space<vmem>>, %arg4: memref<512x256xbf16, #tpu.memory_space<vmem>>, %arg5: memref<1x256xf32, #tpu.memory_space<vmem>>, %arg6: memref<256x128xbf16, #tpu.memory_space<vmem>>, %arg7: memref<1x128xf32, #tpu.memory_space<vmem>>, %arg8: memref<128x128xbf16, #tpu.memory_space<vmem>>, %arg9: memref<1x128xf32, #tpu.memory_space<vmem>>, %arg10: memref<128x128xbf16, #tpu.memory_space<vmem>>, %arg11: memref<1x128xf32, #tpu.memory_space<vmem>>, %arg12: memref<128x128xbf16, #tpu.memory_space<vmem>>, %arg13: memref<1x128xf32, #tpu.memory_space<vmem>>, %arg14: memref<128x128xbf16, #tpu.memory_space<vmem>>, %arg15: memref<1x128xf32, #tpu.memory_space<vmem>>, %arg16: memref<1x1x8xf32, #tpu.memory_space<vmem>>) attributes {dimension_semantics = [#tpu.dimension_semantics<parallel>], iteration_bounds = array<i64: 2>, scalar_prefetch = 0 : i64, scratch_operands = 0 : i64, tpu.core_type = #tpu.core_type<tc>, window_params = [{transform_indices = @transform_0, window_bounds = array<i64: 8, 128>}, {pipeline_mode = #tpu.pipeline_mode<synchronous>, transform_indices = @transform_1, window_bounds = array<i64: 128, 512>}, {pipeline_mode = #tpu.pipeline_mode<synchronous>, transform_indices = @transform_2, window_bounds = array<i64: 1, 512>}, {pipeline_mode = #tpu.pipeline_mode<synchronous>, transform_indices = @transform_3, window_bounds = array<i64: 512, 256>}, {pipeline_mode = #tpu.pipeline_mode<synchronous>, transform_indices = @transform_4, window_bounds = array<i64: 1, 256>}, {pipeline_mode = #tpu.pipeline_mode<synchronous>, transform_indices = @transform_5, window_bounds = array<i64: 256, 128>}, {pipeline_mode = #tpu.pipeline_mode<synchronous>, transform_indices = @transform_6, window_bounds = array<i64: 1, 128>}, {pipeline_mode = #tpu.pipeline_mode<synchronous>, transform_indices = @transform_7, window_bounds = array<i64: 128, 128>}, {pipeline_mode = #tpu.pipeline_mode<synchronous>, transform_indices = @transform_8, window_bounds = array<i64: 1, 128>}, {pipeline_mode = #tpu.pipeline_mode<synchronous>, transform_indices = @transform_9, window_bounds = array<i64: 128, 128>}, {pipeline_mode = #tpu.pipeline_mode<synchronous>, transform_indices = @transform_10, window_bounds = array<i64: 1, 128>}, {pipeline_mode = #tpu.pipeline_mode<synchronous>, transform_indices = @transform_11, window_bounds = array<i64: 128, 128>}, {pipeline_mode = #tpu.pipeline_mode<synchronous>, transform_indices = @transform_12, window_bounds = array<i64: 1, 128>}, {pipeline_mode = #tpu.pipeline_mode<synchronous>, transform_indices = @transform_13, window_bounds = array<i64: 128, 128>}, {pipeline_mode = #tpu.pipeline_mode<synchronous>, transform_indices = @transform_14, window_bounds = array<i64: 1, 128>}, {transform_indices = @transform_15, window_bounds = array<i64: 1, 1, 8>}]} {
    %c0 = arith.constant 0 : index
    %c0_0 = arith.constant 0 : index
    %0 = vector.load %arg1[%c0, %c0_0] : memref<8x128xbf16, #tpu.memory_space<vmem>>, vector<8x128xbf16>
    %c0_1 = arith.constant 0 : index
    %c0_2 = arith.constant 0 : index
    %1 = vector.load %arg2[%c0_1, %c0_2] : memref<128x512xbf16, #tpu.memory_space<vmem>>, vector<128x512xbf16>
    %cst = arith.constant dense<0.000000e+00> : vector<8x512xf32>
    %2 = tpu.matmul %0, %1, %cst {dimension_numbers = #tpu.dot_dimension_numbers<[1], [0], [0], [1], [0, 0, 1, 1], [], []>} : vector<8x128xbf16>, vector<128x512xbf16>, vector<8x512xf32> -> vector<8x512xf32>
    %c0_3 = arith.constant 0 : index
    %c0_4 = arith.constant 0 : index
    %3 = vector.load %arg3[%c0_3, %c0_4] : memref<1x512xf32, #tpu.memory_space<vmem>>, vector<1x512xf32>
    %4 = vector.broadcast %3 : vector<1x512xf32> to vector<8x512xf32>
    %5 = arith.addf %2, %4 : vector<8x512xf32>
    %cst_5 = arith.constant 0.000000e+00 : f32
    %6 = vector.broadcast %cst_5 : f32 to vector<8x512xf32>
    %7 = arith.maximumf %5, %6 : vector<8x512xf32>
    %8 = arith.truncf %7 : vector<8x512xf32> to vector<8x512xbf16>
    %c0_6 = arith.constant 0 : index
    %c0_7 = arith.constant 0 : index
    %9 = vector.load %arg4[%c0_6, %c0_7] : memref<512x256xbf16, #tpu.memory_space<vmem>>, vector<512x256xbf16>
    %cst_8 = arith.constant dense<0.000000e+00> : vector<8x256xf32>
    %10 = tpu.matmul %8, %9, %cst_8 {dimension_numbers = #tpu.dot_dimension_numbers<[1], [0], [0], [1], [0, 0, 1, 1], [], []>} : vector<8x512xbf16>, vector<512x256xbf16>, vector<8x256xf32> -> vector<8x256xf32>
    %c0_9 = arith.constant 0 : index
    %c0_10 = arith.constant 0 : index
    %11 = vector.load %arg5[%c0_9, %c0_10] : memref<1x256xf32, #tpu.memory_space<vmem>>, vector<1x256xf32>
    %12 = vector.broadcast %11 : vector<1x256xf32> to vector<8x256xf32>
    %13 = arith.addf %10, %12 : vector<8x256xf32>
    %cst_11 = arith.constant 0.000000e+00 : f32
    %14 = vector.broadcast %cst_11 : f32 to vector<8x256xf32>
    %15 = arith.maximumf %13, %14 : vector<8x256xf32>
    %16 = arith.truncf %15 : vector<8x256xf32> to vector<8x256xbf16>
    %c0_12 = arith.constant 0 : index
    %c0_13 = arith.constant 0 : index
    %17 = vector.load %arg6[%c0_12, %c0_13] : memref<256x128xbf16, #tpu.memory_space<vmem>>, vector<256x128xbf16>
    %cst_14 = arith.constant dense<0.000000e+00> : vector<8x128xf32>
    %18 = tpu.matmul %16, %17, %cst_14 {dimension_numbers = #tpu.dot_dimension_numbers<[1], [0], [0], [1], [0, 0, 1, 1], [], []>} : vector<8x256xbf16>, vector<256x128xbf16>, vector<8x128xf32> -> vector<8x128xf32>
    %c0_15 = arith.constant 0 : index
    %c0_16 = arith.constant 0 : index
    %19 = vector.load %arg7[%c0_15, %c0_16] : memref<1x128xf32, #tpu.memory_space<vmem>>, vector<1x128xf32>
    %20 = vector.broadcast %19 : vector<1x128xf32> to vector<8x128xf32>
    %21 = arith.addf %18, %20 : vector<8x128xf32>
    %cst_17 = arith.constant 0.000000e+00 : f32
    %22 = vector.broadcast %cst_17 : f32 to vector<8x128xf32>
    %23 = arith.maximumf %21, %22 : vector<8x128xf32>
    %24 = arith.truncf %23 : vector<8x128xf32> to vector<8x128xbf16>
    %c0_18 = arith.constant 0 : index
    %c0_19 = arith.constant 0 : index
    %25 = vector.load %arg8[%c0_18, %c0_19] : memref<128x128xbf16, #tpu.memory_space<vmem>>, vector<128x128xbf16>
    %cst_20 = arith.constant dense<0.000000e+00> : vector<8x128xf32>
    %26 = tpu.matmul %24, %25, %cst_20 {dimension_numbers = #tpu.dot_dimension_numbers<[1], [0], [0], [1], [0, 0, 1, 1], [], []>} : vector<8x128xbf16>, vector<128x128xbf16>, vector<8x128xf32> -> vector<8x128xf32>
    %c0_21 = arith.constant 0 : index
    %c0_22 = arith.constant 0 : index
    %27 = vector.load %arg9[%c0_21, %c0_22] : memref<1x128xf32, #tpu.memory_space<vmem>>, vector<1x128xf32>
    %28 = vector.broadcast %27 : vector<1x128xf32> to vector<8x128xf32>
    %29 = arith.addf %26, %28 : vector<8x128xf32>
    %cst_23 = arith.constant 0.000000e+00 : f32
    %30 = vector.broadcast %cst_23 : f32 to vector<8x128xf32>
    %31 = arith.maximumf %29, %30 : vector<8x128xf32>
    %32 = arith.truncf %31 : vector<8x128xf32> to vector<8x128xbf16>
    %c0_24 = arith.constant 0 : index
    %c0_25 = arith.constant 0 : index
    %33 = vector.load %arg10[%c0_24, %c0_25] : memref<128x128xbf16, #tpu.memory_space<vmem>>, vector<128x128xbf16>
    %cst_26 = arith.constant dense<0.000000e+00> : vector<8x128xf32>
    %34 = tpu.matmul %32, %33, %cst_26 {dimension_numbers = #tpu.dot_dimension_numbers<[1], [0], [0], [1], [0, 0, 1, 1], [], []>} : vector<8x128xbf16>, vector<128x128xbf16>, vector<8x128xf32> -> vector<8x128xf32>
    %c0_27 = arith.constant 0 : index
    %c0_28 = arith.constant 0 : index
    %35 = vector.load %arg11[%c0_27, %c0_28] : memref<1x128xf32, #tpu.memory_space<vmem>>, vector<1x128xf32>
    %36 = vector.broadcast %35 : vector<1x128xf32> to vector<8x128xf32>
    %37 = arith.addf %34, %36 : vector<8x128xf32>
    %cst_29 = arith.constant 0.000000e+00 : f32
    %38 = vector.broadcast %cst_29 : f32 to vector<8x128xf32>
    %39 = arith.maximumf %37, %38 : vector<8x128xf32>
    %40 = arith.truncf %39 : vector<8x128xf32> to vector<8x128xbf16>
    %c0_30 = arith.constant 0 : index
    %c0_31 = arith.constant 0 : index
    %41 = vector.load %arg12[%c0_30, %c0_31] : memref<128x128xbf16, #tpu.memory_space<vmem>>, vector<128x128xbf16>
    %cst_32 = arith.constant dense<0.000000e+00> : vector<8x128xf32>
    %42 = tpu.matmul %40, %41, %cst_32 {dimension_numbers = #tpu.dot_dimension_numbers<[1], [0], [0], [1], [0, 0, 1, 1], [], []>} : vector<8x128xbf16>, vector<128x128xbf16>, vector<8x128xf32> -> vector<8x128xf32>
    %c0_33 = arith.constant 0 : index
    %c0_34 = arith.constant 0 : index
    %43 = vector.load %arg13[%c0_33, %c0_34] : memref<1x128xf32, #tpu.memory_space<vmem>>, vector<1x128xf32>
    %44 = vector.broadcast %43 : vector<1x128xf32> to vector<8x128xf32>
    %45 = arith.addf %42, %44 : vector<8x128xf32>
    %cst_35 = arith.constant 0.000000e+00 : f32
    %46 = vector.broadcast %cst_35 : f32 to vector<8x128xf32>
    %47 = arith.maximumf %45, %46 : vector<8x128xf32>
    %48 = arith.truncf %47 : vector<8x128xf32> to vector<8x128xbf16>
    %c0_36 = arith.constant 0 : index
    %c0_37 = arith.constant 0 : index
    %49 = vector.load %arg14[%c0_36, %c0_37] : memref<128x128xbf16, #tpu.memory_space<vmem>>, vector<128x128xbf16>
    %cst_38 = arith.constant dense<0.000000e+00> : vector<8x128xf32>
    %50 = tpu.matmul %48, %49, %cst_38 {dimension_numbers = #tpu.dot_dimension_numbers<[1], [0], [0], [1], [0, 0, 1, 1], [], []>} : vector<8x128xbf16>, vector<128x128xbf16>, vector<8x128xf32> -> vector<8x128xf32>
    %c0_39 = arith.constant 0 : index
    %c0_40 = arith.constant 0 : index
    %51 = vector.load %arg15[%c0_39, %c0_40] : memref<1x128xf32, #tpu.memory_space<vmem>>, vector<1x128xf32>
    %52 = vector.broadcast %51 : vector<1x128xf32> to vector<8x128xf32>
    %53 = arith.addf %50, %52 : vector<8x128xf32>
    %54 = tpu.transpose %53, [1, 0] : vector<8x128xf32> -> vector<128x8xf32>
    %55 = vector.extract_strided_slice %54 {offsets = [0, 0], sizes = [1, 8], strides = [1, 1]} : vector<128x8xf32> to vector<1x8xf32>
    %56 = vector.shape_cast %55 : vector<1x8xf32> to vector<1x1x8xf32>
    %c0_41 = arith.constant 0 : index
    %c0_42 = arith.constant 0 : index
    %c0_43 = arith.constant 0 : index
    %57 = vector.load %arg16[%c0_41, %c0_42, %c0_43] : memref<1x1x8xf32, #tpu.memory_space<vmem>>, vector<1x1x8xf32>
    tpu.vector_store %arg16[%c0_41, %c0_42, %c0_43], %56 {strides = array<i32>} : memref<1x1x8xf32, #tpu.memory_space<vmem>>, vector<1x1x8xf32>,
    return
  }
  func.func @transform_0(%arg0: i32) -> (i32, i32) {
    %c0_i32 = arith.constant 0 : i32
    %c0_i32_0 = arith.constant 0 : i32
    return %arg0, %c0_i32 : i32, i32
  }
  func.func @transform_1(%arg0: i32) -> (i32, i32) {
    %c0_i32 = arith.constant 0 : i32
    %c0_i32_0 = arith.constant 0 : i32
    %c0_i32_1 = arith.constant 0 : i32
    return %c0_i32, %c0_i32_0 : i32, i32
  }
  func.func @transform_2(%arg0: i32) -> (i32, i32) {
    %c0_i32 = arith.constant 0 : i32
    %c0_i32_0 = arith.constant 0 : i32
    %c0_i32_1 = arith.constant 0 : i32
    return %c0_i32, %c0_i32_0 : i32, i32
  }
  func.func @transform_3(%arg0: i32) -> (i32, i32) {
    %c0_i32 = arith.constant 0 : i32
    %c0_i32_0 = arith.constant 0 : i32
    %c0_i32_1 = arith.constant 0 : i32
    return %c0_i32, %c0_i32_0 : i32, i32
  }
  func.func @transform_4(%arg0: i32) -> (i32, i32) {
    %c0_i32 = arith.constant 0 : i32
    %c0_i32_0 = arith.constant 0 : i32
    %c0_i32_1 = arith.constant 0 : i32
    return %c0_i32, %c0_i32_0 : i32, i32
  }
  func.func @transform_5(%arg0: i32) -> (i32, i32) {
    %c0_i32 = arith.constant 0 : i32
    %c0_i32_0 = arith.constant 0 : i32
    %c0_i32_1 = arith.constant 0 : i32
    return %c0_i32, %c0_i32_0 : i32, i32
  }
  func.func @transform_6(%arg0: i32) -> (i32, i32) {
    %c0_i32 = arith.constant 0 : i32
    %c0_i32_0 = arith.constant 0 : i32
    %c0_i32_1 = arith.constant 0 : i32
    return %c0_i32, %c0_i32_0 : i32, i32
  }
  func.func @transform_7(%arg0: i32) -> (i32, i32) {
    %c0_i32 = arith.constant 0 : i32
    %c0_i32_0 = arith.constant 0 : i32
    %c0_i32_1 = arith.constant 0 : i32
    return %c0_i32, %c0_i32_0 : i32, i32
  }
  func.func @transform_8(%arg0: i32) -> (i32, i32) {
    %c0_i32 = arith.constant 0 : i32
    %c0_i32_0 = arith.constant 0 : i32
    %c0_i32_1 = arith.constant 0 : i32
    return %c0_i32, %c0_i32_0 : i32, i32
  }
  func.func @transform_9(%arg0: i32) -> (i32, i32) {
    %c0_i32 = arith.constant 0 : i32
    %c0_i32_0 = arith.constant 0 : i32
    %c0_i32_1 = arith.constant 0 : i32
    return %c0_i32, %c0_i32_0 : i32, i32
  }
  func.func @transform_10(%arg0: i32) -> (i32, i32) {
    %c0_i32 = arith.constant 0 : i32
    %c0_i32_0 = arith.constant 0 : i32
    %c0_i32_1 = arith.constant 0 : i32
    return %c0_i32, %c0_i32_0 : i32, i32
  }
  func.func @transform_11(%arg0: i32) -> (i32, i32) {
    %c0_i32 = arith.constant 0 : i32
    %c0_i32_0 = arith.constant 0 : i32
    %c0_i32_1 = arith.constant 0 : i32
    return %c0_i32, %c0_i32_0 : i32, i32
  }
  func.func @transform_12(%arg0: i32) -> (i32, i32) {
    %c0_i32 = arith.constant 0 : i32
    %c0_i32_0 = arith.constant 0 : i32
    %c0_i32_1 = arith.constant 0 : i32
    return %c0_i32, %c0_i32_0 : i32, i32
  }
  func.func @transform_13(%arg0: i32) -> (i32, i32) {
    %c0_i32 = arith.constant 0 : i32
    %c0_i32_0 = arith.constant 0 : i32
    %c0_i32_1 = arith.constant 0 : i32
    return %c0_i32, %c0_i32_0 : i32, i32
  }
  func.func @transform_14(%arg0: i32) -> (i32, i32) {
    %c0_i32 = arith.constant 0 : i32
    %c0_i32_0 = arith.constant 0 : i32
    %c0_i32_1 = arith.constant 0 : i32
    return %c0_i32, %c0_i32_0 : i32, i32
  }
  func.func @transform_15(%arg0: i32) -> (i32, i32, i32) {
    %c0_i32 = arith.constant 0 : i32
    %c0_i32_0 = arith.constant 0 : i32
    %c0_i32_1 = arith.constant 0 : i32
    return %arg0, %c0_i32, %c0_i32_0 : i32, i32, i32
  }
}

</mosaic_0001>

<llo_original>
// kernel: tpu_custom_call.1
$region0: #{tpu_custom_call.1}
  #allocation0 [shape = 'u32[]', space=smem, size = 0x4, offset = 0x4, fixed_abs, tag = 'smem constant byte address 0x4 - core index']
  #allocation1 [shape = 'u32[144,128]{1,0:T(1,128)}', space=vmem, size = 0x12000, scoped, tag = 'internal scratch']
  %s0 = inlined_call_operand.hbm [shape: bf16[16,128], index: 0, kind: input, shape index: {}]
  %s1 = inlined_call_operand.hbm [shape: bf16[128,512], index: 1, kind: input, shape index: {}]
  %s2 = inlined_call_operand.hbm [shape: f32[1,512], index: 2, kind: input, shape index: {}]
  %s3 = inlined_call_operand.hbm [shape: bf16[512,256], index: 3, kind: input, shape index: {}]
  %s4 = inlined_call_operand.vmem [shape: f32[1,256], index: 4, kind: input, shape index: {}]
  %s5 = inlined_call_operand.hbm [shape: bf16[256,128], index: 5, kind: input, shape index: {}]
  %s6 = inlined_call_operand.vmem [shape: f32[1,128], index: 6, kind: input, shape index: {}]
  %s7 = inlined_call_operand.hbm [shape: bf16[128,128], index: 7, kind: input, shape index: {}]
  %s8 = inlined_call_operand.vmem [shape: f32[1,128], index: 8, kind: input, shape index: {}]
  %s9 = inlined_call_operand.hbm [shape: bf16[128,128], index: 9, kind: input, shape index: {}]
  %s10 = inlined_call_operand.vmem [shape: f32[1,128], index: 10, kind: input, shape index: {}]
  %s11 = inlined_call_operand.hbm [shape: bf16[128,128], index: 11, kind: input, shape index: {}]
  %s12 = inlined_call_operand.vmem [shape: f32[1,128], index: 12, kind: input, shape index: {}]
  %s13 = inlined_call_operand.hbm [shape: bf16[128,128], index: 13, kind: input, shape index: {}]
  %s14 = inlined_call_operand.vmem [shape: f32[1,128], index: 14, kind: input, shape index: {}]
  %s15 = inlined_call_operand.hbm [shape: f32[2,1,8], index: 15, kind: output, shape index: {}]
  %s16 = sld [smem:[#allocation0]]
  $region129: #{tpu_custom_call.1} parent=0
    _
  %s18 = ssub.s32 1, %s16
  %s19 = scalar_select 0, %s18, %s16
  $region1: #{tpu_custom_call.1} parent=0
    #allocation2 [shape = 'u8[4096]{0}', space=vmem, size = 0x1000, scoped, tag = 'input window, operand 0']
    #allocation3 [shape = 's32[2]{0}', space=sflag, size = 0x8, scoped, tag = 'scoped memory for tpu_custom_call.1']
    #allocation4 [shape = 's32[2]{0}', space=sflag, size = 0x8, scoped, tag = 'scoped memory for tpu_custom_call.1']
    #allocation5 [shape = 'u8[131072]{0}', space=vmem, size = 0x20000, scoped, tag = 'input window, operand 1, single buffered']
    #allocation6 [shape = 's32[1]{0}', space=sflag, size = 0x4, scoped, tag = 'scoped memory for tpu_custom_call.1']
    #allocation7 [shape = 'u8[2048]{0}', space=vmem, size = 0x800, scoped, tag = 'input window, operand 2, single buffered']
    #allocation8 [shape = 'u8[262144]{0}', space=vmem, size = 0x40000, scoped, tag = 'input window, operand 3, single buffered']
    #allocation9 [shape = 's32[1]{0}', space=sflag, size = 0x4, scoped, tag = 'scoped memory for tpu_custom_call.1']
    #allocation10 [shape = 'u8[65536]{0}', space=vmem, size = 0x10000, scoped, tag = 'input window, operand 5, single buffered']
    #allocation11 [shape = 'u8[32768]{0}', space=vmem, size = 0x8000, scoped, tag = 'input window, operand 7, single buffered']
    #allocation12 [shape = 's32[1]{0}', space=sflag, size = 0x4, scoped, tag = 'scoped memory for tpu_custom_call.1']
    #allocation13 [shape = 'u8[32768]{0}', space=vmem, size = 0x8000, scoped, tag = 'input window, operand 9, single buffered']
    #allocation14 [shape = 'u8[32768]{0}', space=vmem, size = 0x8000, scoped, tag = 'input window, operand 11, single buffered']
    #allocation15 [shape = 's32[1]{0}', space=sflag, size = 0x4, scoped, tag = 'scoped memory for tpu_custom_call.1']
    #allocation16 [shape = 'u8[32768]{0}', space=vmem, size = 0x8000, scoped, tag = 'input window, operand 13, single buffered']
    #allocation17 [shape = 'u8[1024]{0}', space=vmem, size = 0x400, scoped, tag = 'output window, operand 0']
    %20 = vsyncpa [#allocation3], 0
    %s21 = scalar_lea.sflag [#allocation3], 1
    %22 = vsyncpa %s21, 0
    %23 = vsyncpa [#allocation6], 0
    %24 = vsyncpa [#allocation9], 0
    %25 = vsyncpa [#allocation12], 0
    %26 = vsyncpa [#allocation15], 0
    %27 = vsyncpa [#allocation4], 0
    %s28 = scalar_lea.sflag [#allocation4], 1
    %29 = vsyncpa %s28, 0
    loop: start=0, step=1, limit=4
    $region2: #{tpu_custom_call.1} parent=1 // loop_pre_header
      _
    $region3: #{tpu_custom_call.1} parent=1 // loop_header
      %s31 = sphi 0, %s35
      %p32 = scmp.ge.s32.totalorder %s31, 4
      %s41 = sphi 0, %s43
      %s44 = sphi 0, %s41
      %s45 = sphi 0, %s44
      %s61 = sphi 0, %s45
      %s65 = sphi 0, %s65
      %s67 = sphi 0, %s65
      %s68 = sphi 0, %s67
      %s82 = sphi 0, %s68
      %s86 = sphi 0, %s86
      %s88 = sphi 0, %s86
      %s89 = sphi 0, %s88
      %s103 = sphi 0, %s89
      %s107 = sphi 0, %s107
      %s109 = sphi 0, %s107
      %s110 = sphi 0, %s109
      %s124 = sphi 0, %s110
      %s128 = sphi 0, %s128
      %s130 = sphi 0, %s128
      %s131 = sphi 0, %s130
      %s145 = sphi 0, %s131
      %s149 = sphi 0, %s149
      %s151 = sphi 0, %s149
      %s152 = sphi 0, %s151
      %s166 = sphi 0, %s152
      %s170 = sphi 0, %s170
      %s172 = sphi 0, %s170
      %s173 = sphi 0, %s172
      %s187 = sphi 0, %s173
      %s191 = sphi 0, %s191
      %s193 = sphi 0, %s191
      %s194 = sphi 0, %s193
      %s208 = sphi 0, %s194
      %s212 = sphi 0, %s212
      %s214 = sphi 0, %s212
      %s215 = sphi 0, %s214
      %s229 = sphi 0, %s215
      %s233 = sphi 0, %s233
      %s235 = sphi 0, %s233
      %s236 = sphi 0, %s235
      %s250 = sphi 0, %s236
      %s254 = sphi 0, %s254
      %s256 = sphi 0, %s254
      %s257 = sphi 0, %s256
      %s271 = sphi 0, %s257
      %s275 = sphi 0, %s275
      %s277 = sphi 0, %s275
      %s278 = sphi 0, %s277
      %s292 = sphi 0, %s278
      %s296 = sphi 0, %s296
      %s298 = sphi 0, %s296
      %s299 = sphi 0, %s298
      %s313 = sphi 0, %s299
      %s317 = sphi 0, %s317
      %s319 = sphi 0, %s317
      %s320 = sphi 0, %s319
      %s334 = sphi 0, %s320
      %s338 = sphi 0, %s338
      %s340 = sphi 0, %s338
      %s341 = sphi 0, %s340
      %s355 = sphi 0, %s341
      %s361 = sphi 0, %s363
      %s364 = sphi 0, %s361
      %s365 = sphi 0, %s364
      %s381 = sphi 0, %s365
    $region4: #{tpu_custom_call.1} parent=1 // loop_header_branch
      %34 = sbr.rel (%p32) target = $region8
    $region5: #{tpu_custom_call.1} parent=1 // loop_body
      %s36 = ssub.s32 %s31, 1
      %s37 = ssub.s32 %s31, 2
      %s38 = sadd.s32 %s31, 1
      %s39 = ssub.s32 %s31, %s38
      %p40 = scmp.eq.s32.totalorder %s39, 0
      %s42 = sadd.s32 %s41, 1
      %s43 = scalar_select %p40, %s41, %s42
      %p46 = pneg %p40
      %p47 = scmp.eq.s32.totalorder %s31, 1
      %p48 = por %p46, %p47
      %p49 = scmp.ne.s32.totalorder %s41, %s44
      %p50 = scmp.eq.s32.totalorder %s31, 0
      %p51 = por %p49, %p50
      %p52 = scmp.ne.s32.totalorder %s41, %s44
      %p53 = scmp.eq.s32.totalorder %s36, 1
      %p54 = por %p52, %p53
      %p55 = scmp.ne.s32.totalorder %s44, %s45
      %p56 = scmp.eq.s32.totalorder %s36, 0
      %p57 = por %p55, %p56
      %p58 = scmp.ne.s32.totalorder %s44, %s45
      %p59 = scmp.eq.s32.totalorder %s37, 1
      %p60 = por %p58, %p59
      %p62 = scmp.ne.s32.totalorder %s45, %s61
      %p63 = scmp.eq.s32.totalorder %s37, 0
      %p64 = por %p62, %p63
      %s66 = sadd.s32 %s65, 1
      %p69 = scmp.eq.s32.totalorder %s31, 1
      %p70 = scmp.ne.s32.totalorder %s65, %s67
      %p71 = scmp.eq.s32.totalorder %s31, 0
      %p72 = por %p70, %p71
      %p73 = scmp.ne.s32.totalorder %s65, %s67
      %p74 = scmp.eq.s32.totalorder %s36, 1
      %p75 = por %p73, %p74
      %p76 = scmp.ne.s32.totalorder %s67, %s68
      %p77 = scmp.eq.s32.totalorder %s36, 0
      %p78 = por %p76, %p77
      %p79 = scmp.ne.s32.totalorder %s67, %s68
      %p80 = scmp.eq.s32.totalorder %s37, 1
      %p81 = por %p79, %p80
      %p83 = scmp.ne.s32.totalorder %s68, %s82
      %p84 = scmp.eq.s32.totalorder %s37, 0
      %p85 = por %p83, %p84
      %s87 = sadd.s32 %s86, 1
      %p90 = scmp.eq.s32.totalorder %s31, 1
      %p91 = scmp.ne.s32.totalorder %s86, %s88
      %p92 = scmp.eq.s32.totalorder %s31, 0
      %p93 = por %p91, %p92
      %p94 = scmp.ne.s32.totalorder %s86, %s88
      %p95 = scmp.eq.s32.totalorder %s36, 1
      %p96 = por %p94, %p95
      %p97 = scmp.ne.s32.totalorder %s88, %s89
      %p98 = scmp.eq.s32.totalorder %s36, 0
      %p99 = por %p97, %p98
      %p100 = scmp.ne.s32.totalorder %s88, %s89
      %p101 = scmp.eq.s32.totalorder %s37, 1
      %p102 = por %p100, %p101
      %p104 = scmp.ne.s32.totalorder %s89, %s103
      %p105 = scmp.eq.s32.totalorder %s37, 0
      %p106 = por %p104, %p105
      %s108 = sadd.s32 %s107, 1
      %p111 = scmp.eq.s32.totalorder %s31, 1
      %p112 = scmp.ne.s32.totalorder %s107, %s109
      %p113 = scmp.eq.s32.totalorder %s31, 0
      %p114 = por %p112, %p113
      %p115 = scmp.ne.s32.totalorder %s107, %s109
      %p116 = scmp.eq.s32.totalorder %s36, 1
      %p117 = por %p115, %p116
      %p118 = scmp.ne.s32.totalorder %s109, %s110
      %p119 = scmp.eq.s32.totalorder %s36, 0
      %p120 = por %p118, %p119
      %p121 = scmp.ne.s32.totalorder %s109, %s110
      %p122 = scmp.eq.s32.totalorder %s37, 1
      %p123 = por %p121, %p122
      %p125 = scmp.ne.s32.totalorder %s110, %s124
      %p126 = scmp.eq.s32.totalorder %s37, 0
      %p127 = por %p125, %p126
      %s129 = sadd.s32 %s128, 1
      %p132 = scmp.eq.s32.totalorder %s31, 1
      %p133 = scmp.ne.s32.totalorder %s128, %s130
      %p134 = scmp.eq.s32.totalorder %s31, 0
      %p135 = por %p133, %p134
      %p136 = scmp.ne.s32.totalorder %s128, %s130
      %p137 = scmp.eq.s32.totalorder %s36, 1
      %p138 = por %p136, %p137
      %p139 = scmp.ne.s32.totalorder %s130, %s131
      %p140 = scmp.eq.s32.totalorder %s36, 0
      %p141 = por %p139, %p140
      %p142 = scmp.ne.s32.totalorder %s130, %s131
      %p143 = scmp.eq.s32.totalorder %s37, 1
      %p144 = por %p142, %p143
      %p146 = scmp.ne.s32.totalorder %s131, %s145
      %p147 = scmp.eq.s32.totalorder %s37, 0
      %p148 = por %p146, %p147
      %s150 = sadd.s32 %s149, 1
      %p153 = scmp.eq.s32.totalorder %s31, 1
      %p154 = scmp.ne.s32.totalorder %s149, %s151
      %p155 = scmp.eq.s32.totalorder %s31, 0
      %p156 = por %p154, %p155
      %p157 = scmp.ne.s32.totalorder %s149, %s151
      %p158 = scmp.eq.s32.totalorder %s36, 1
      %p159 = por %p157, %p158
      %p160 = scmp.ne.s32.totalorder %s151, %s152
      %p161 = scmp.eq.s32.totalorder %s36, 0
      %p162 = por %p160, %p161
      %p163 = scmp.ne.s32.totalorder %s151, %s152
      %p164 = scmp.eq.s32.totalorder %s37, 1
      %p165 = por %p163, %p164
      %p167 = scmp.ne.s32.totalorder %s152, %s166
      %p168 = scmp.eq.s32.totalorder %s37, 0
      %p169 = por %p167, %p168
      %s171 = sadd.s32 %s170, 1
      %p174 = scmp.eq.s32.totalorder %s31, 1
      %p175 = scmp.ne.s32.totalorder %s170, %s172
      %p176 = scmp.eq.s32.totalorder %s31, 0
      %p177 = por %p175, %p176
      %p178 = scmp.ne.s32.totalorder %s170, %s172
      %p179 = scmp.eq.s32.totalorder %s36, 1
      %p180 = por %p178, %p179
      %p181 = scmp.ne.s32.totalorder %s172, %s173
      %p182 = scmp.eq.s32.totalorder %s36, 0
      %p183 = por %p181, %p182
      %p184 = scmp.ne.s32.totalorder %s172, %s173
      %p185 = scmp.eq.s32.totalorder %s37, 1
      %p186 = por %p184, %p185
      %p188 = scmp.ne.s32.totalorder %s173, %s187
      %p189 = scmp.eq.s32.totalorder %s37, 0
      %p190 = por %p188, %p189
      %s192 = sadd.s32 %s191, 1
      %p195 = scmp.eq.s32.totalorder %s31, 1
      %p196 = scmp.ne.s32.totalorder %s191, %s193
      %p197 = scmp.eq.s32.totalorder %s31, 0
      %p198 = por %p196, %p197
      %p199 = scmp.ne.s32.totalorder %s191, %s193
      %p200 = scmp.eq.s32.totalorder %s36, 1
      %p201 = por %p199, %p200
      %p202 = scmp.ne.s32.totalorder %s193, %s194
      %p203 = scmp.eq.s32.totalorder %s36, 0
      %p204 = por %p202, %p203
      %p205 = scmp.ne.s32.totalorder %s193, %s194
      %p206 = scmp.eq.s32.totalorder %s37, 1
      %p207 = por %p205, %p206
      %p209 = scmp.ne.s32.totalorder %s194, %s208
      %p210 = scmp.eq.s32.totalorder %s37, 0
      %p211 = por %p209, %p210
      %s213 = sadd.s32 %s212, 1
      %p216 = scmp.eq.s32.totalorder %s31, 1
      %p217 = scmp.ne.s32.totalorder %s212, %s214
      %p218 = scmp.eq.s32.totalorder %s31, 0
      %p219 = por %p217, %p218
      %p220 = scmp.ne.s32.totalorder %s212, %s214
      %p221 = scmp.eq.s32.totalorder %s36, 1
      %p222 = por %p220, %p221
      %p223 = scmp.ne.s32.totalorder %s214, %s215
      %p224 = scmp.eq.s32.totalorder %s36, 0
      %p225 = por %p223, %p224
      %p226 = scmp.ne.s32.totalorder %s214, %s215
      %p227 = scmp.eq.s32.totalorder %s37, 1
      %p228 = por %p226, %p227
      %p230 = scmp.ne.s32.totalorder %s215, %s229
      %p231 = scmp.eq.s32.totalorder %s37, 0
      %p232 = por %p230, %p231
      %s234 = sadd.s32 %s233, 1
      %p237 = scmp.eq.s32.totalorder %s31, 1
      %p238 = scmp.ne.s32.totalorder %s233, %s235
      %p239 = scmp.eq.s32.totalorder %s31, 0
      %p240 = por %p238, %p239
      %p241 = scmp.ne.s32.totalorder %s233, %s235
      %p242 = scmp.eq.s32.totalorder %s36, 1
      %p243 = por %p241, %p242
      %p244 = scmp.ne.s32.totalorder %s235, %s236
      %p245 = scmp.eq.s32.totalorder %s36, 0
      %p246 = por %p244, %p245
      %p247 = scmp.ne.s32.totalorder %s235, %s236
      %p248 = scmp.eq.s32.totalorder %s37, 1
      %p249 = por %p247, %p248
      %p251 = scmp.ne.s32.totalorder %s236, %s250
      %p252 = scmp.eq.s32.totalorder %s37, 0
      %p253 = por %p251, %p252
      %s255 = sadd.s32 %s254, 1
      %p258 = scmp.eq.s32.totalorder %s31, 1
      %p259 = scmp.ne.s32.totalorder %s254, %s256
      %p260 = scmp.eq.s32.totalorder %s31, 0
      %p261 = por %p259, %p260
      %p262 = scmp.ne.s32.totalorder %s254, %s256
      %p263 = scmp.eq.s32.totalorder %s36, 1
      %p264 = por %p262, %p263
      %p265 = scmp.ne.s32.totalorder %s256, %s257
      %p266 = scmp.eq.s32.totalorder %s36, 0
      %p267 = por %p265, %p266
      %p268 = scmp.ne.s32.totalorder %s256, %s257
      %p269 = scmp.eq.s32.totalorder %s37, 1
      %p270 = por %p268, %p269
      %p272 = scmp.ne.s32.totalorder %s257, %s271
      %p273 = scmp.eq.s32.totalorder %s37, 0
      %p274 = por %p272, %p273
      %s276 = sadd.s32 %s275, 1
      %p279 = scmp.eq.s32.totalorder %s31, 1
      %p280 = scmp.ne.s32.totalorder %s275, %s277
      %p281 = scmp.eq.s32.totalorder %s31, 0
      %p282 = por %p280, %p281
      %p283 = scmp.ne.s32.totalorder %s275, %s277
      %p284 = scmp.eq.s32.totalorder %s36, 1
      %p285 = por %p283, %p284
      %p286 = scmp.ne.s32.totalorder %s277, %s278
      %p287 = scmp.eq.s32.totalorder %s36, 0
      %p288 = por %p286, %p287
      %p289 = scmp.ne.s32.totalorder %s277, %s278
      %p290 = scmp.eq.s32.totalorder %s37, 1
      %p291 = por %p289, %p290
      %p293 = scmp.ne.s32.totalorder %s278, %s292
      %p294 = scmp.eq.s32.totalorder %s37, 0
      %p295 = por %p293, %p294
      %s297 = sadd.s32 %s296, 1
      %p300 = scmp.eq.s32.totalorder %s31, 1
      %p301 = scmp.ne.s32.totalorder %s296, %s298
      %p302 = scmp.eq.s32.totalorder %s31, 0
      %p303 = por %p301, %p302
      %p304 = scmp.ne.s32.totalorder %s296, %s298
      %p305 = scmp.eq.s32.totalorder %s36, 1
      %p306 = por %p304, %p305
      %p307 = scmp.ne.s32.totalorder %s298, %s299
      %p308 = scmp.eq.s32.totalorder %s36, 0
      %p309 = por %p307, %p308
      %p310 = scmp.ne.s32.totalorder %s298, %s299
      %p311 = scmp.eq.s32.totalorder %s37, 1
      %p312 = por %p310, %p311
      %p314 = scmp.ne.s32.totalorder %s299, %s313
      %p315 = scmp.eq.s32.totalorder %s37, 0
      %p316 = por %p314, %p315
      %s318 = sadd.s32 %s317, 1
      %p321 = scmp.eq.s32.totalorder %s31, 1
      %p322 = scmp.ne.s32.totalorder %s317, %s319
      %p323 = scmp.eq.s32.totalorder %s31, 0
      %p324 = por %p322, %p323
      %p325 = scmp.ne.s32.totalorder %s317, %s319
      %p326 = scmp.eq.s32.totalorder %s36, 1
      %p327 = por %p325, %p326
      %p328 = scmp.ne.s32.totalorder %s319, %s320
      %p329 = scmp.eq.s32.totalorder %s36, 0
      %p330 = por %p328, %p329
      %p331 = scmp.ne.s32.totalorder %s319, %s320
      %p332 = scmp.eq.s32.totalorder %s37, 1
      %p333 = por %p331, %p332
      %p335 = scmp.ne.s32.totalorder %s320, %s334
      %p336 = scmp.eq.s32.totalorder %s37, 0
      %p337 = por %p335, %p336
      %s339 = sadd.s32 %s338, 1
      %p342 = scmp.eq.s32.totalorder %s31, 1
      %p343 = scmp.ne.s32.totalorder %s338, %s340
      %p344 = scmp.eq.s32.totalorder %s31, 0
      %p345 = por %p343, %p344
      %p346 = scmp.ne.s32.totalorder %s338, %s340
      %p347 = scmp.eq.s32.totalorder %s36, 1
      %p348 = por %p346, %p347
      %p349 = scmp.ne.s32.totalorder %s340, %s341
      %p350 = scmp.eq.s32.totalorder %s36, 0
      %p351 = por %p349, %p350
      %p352 = scmp.ne.s32.totalorder %s340, %s341
      %p353 = scmp.eq.s32.totalorder %s37, 1
      %p354 = por %p352, %p353
      %p356 = scmp.ne.s32.totalorder %s341, %s355
      %p357 = scmp.eq.s32.totalorder %s37, 0
      %p358 = por %p356, %p357
      %s359 = ssub.s32 %s31, %s38
      %p360 = scmp.eq.s32.totalorder %s359, 0
      %s362 = sadd.s32 %s361, 1
      %s363 = scalar_select %p360, %s361, %s362
      %p366 = pneg %p360
      %p367 = scmp.eq.s32.totalorder %s31, 1
      %p368 = por %p366, %p367
      %p369 = scmp.ne.s32.totalorder %s361, %s364
      %p370 = scmp.eq.s32.totalorder %s31, 0
      %p371 = por %p369, %p370
      %p372 = scmp.ne.s32.totalorder %s361, %s364
      %p373 = scmp.eq.s32.totalorder %s36, 1
      %p374 = por %p372, %p373
      %p375 = scmp.ne.s32.totalorder %s364, %s365
      %p376 = scmp.eq.s32.totalorder %s36, 0
      %p377 = por %p375, %p376
      %p378 = scmp.ne.s32.totalorder %s364, %s365
      %p379 = scmp.eq.s32.totalorder %s37, 1
      %p380 = por %p378, %p379
      %p382 = scmp.ne.s32.totalorder %s365, %s381
      %p383 = scmp.eq.s32.totalorder %s37, 0
      %p384 = por %p382, %p383
      %p385 = scmp.le.s32.totalorder 1, %s31
      %p386 = scmp.lt.s32.totalorder %s31, 3
      %p387 = pnand %p385, %p386
      %p388 = pneg %p387
      // Predicated region
      $region9: #{tpu_custom_call.1} parent=5 // pred_check
        _
      $region10: #{tpu_custom_call.1} parent=5 // pred_check_branch
        %390 = sbr.rel (%p387) target = $region12
      $region11: #{tpu_custom_call.1} parent=5 // pred_region
        %s391 = ssub.s32 %s31, 1
        // Predicated region
        $region13: #{tpu_custom_call.1} parent=11 // pred_check
          %p392 = pneg %p78
        $region14: #{tpu_custom_call.1} parent=11 // pred_check_branch
          %394 = sbr.rel (%p392) target = $region16
        $region15: #{tpu_custom_call.1} parent=11 // pred_region
          %s396 = ssub.s32 4096, 4096
          %397 = vsyncadd [#allocation6], %s396
          %s398 = sshll.u32 [#allocation5], 4
          %s399 = int_to_ptr.vmem [resolvable:$true] %s398
          %404 = dma.hbm_to_vmem [thread:$0]  %s1, 4096, %s399, [#allocation6], 256, 256, 16
        $region16: #{tpu_custom_call.1} parent=11 // pred_fallthru
          _
        // Predicated region
        $region17: #{tpu_custom_call.1} parent=11 // pred_check
          %p405 = pneg %p99
        $region18: #{tpu_custom_call.1} parent=11 // pred_check_branch
          %407 = sbr.rel (%p405) target = $region20
        $region19: #{tpu_custom_call.1} parent=11 // pred_region
          %s409 = ssub.s32 64, 64
          %410 = vsyncadd [#allocation6], %s409
          %s412 = sshll.u32 [#allocation7], 4
          %s413 = int_to_ptr.vmem [resolvable:$true] %s412
          %415 = dma.hbm_to_vmem [thread:$0]  %s2, 64, %s413, [#allocation6]
        $region20: #{tpu_custom_call.1} parent=11 // pred_fallthru
          _
        // Predicated region
        $region21: #{tpu_custom_call.1} parent=11 // pred_check
          %p416 = pneg %p120
        $region22: #{tpu_custom_call.1} parent=11 // pred_check_branch
          %418 = sbr.rel (%p416) target = $region24
        $region23: #{tpu_custom_call.1} parent=11 // pred_region
          %s420 = ssub.s32 8192, 8192
          %421 = vsyncadd [#allocation9], %s420
          %s422 = sshll.u32 [#allocation8], 4
          %s423 = int_to_ptr.vmem [resolvable:$true] %s422
          %428 = dma.hbm_to_vmem [thread:$0]  %s3, 8192, %s423, [#allocation9], 128, 128, 8
        $region24: #{tpu_custom_call.1} parent=11 // pred_fallthru
          _
        // Predicated region
        $region25: #{tpu_custom_call.1} parent=11 // pred_check
          %p429 = pneg %p141
        $region26: #{tpu_custom_call.1} parent=11 // pred_check_branch
          %431 = sbr.rel (%p429) target = $region28
        $region27: #{tpu_custom_call.1} parent=11 // pred_region
          _
        $region28: #{tpu_custom_call.1} parent=11 // pred_fallthru
          _
        // Predicated region
        $region29: #{tpu_custom_call.1} parent=11 // pred_check
          %p432 = pneg %p162
        $region30: #{tpu_custom_call.1} parent=11 // pred_check_branch
          %434 = sbr.rel (%p432) target = $region32
        $region31: #{tpu_custom_call.1} parent=11 // pred_region
          %s436 = ssub.s32 2048, 2048
          %437 = vsyncadd [#allocation9], %s436
          %s438 = sshll.u32 [#allocation10], 4
          %s439 = int_to_ptr.vmem [resolvable:$true] %s438
          %444 = dma.hbm_to_vmem [thread:$0]  %s5, 2048, %s439, [#allocation9], 64, 64, 4
        $region32: #{tpu_custom_call.1} parent=11 // pred_fallthru
          _
        // Predicated region
        $region33: #{tpu_custom_call.1} parent=11 // pred_check
          %p445 = pneg %p183
        $region34: #{tpu_custom_call.1} parent=11 // pred_check_branch
          %447 = sbr.rel (%p445) target = $region36
        $region35: #{tpu_custom_call.1} parent=11 // pred_region
          _
        $region36: #{tpu_custom_call.1} parent=11 // pred_fallthru
          _
        // Predicated region
        $region37: #{tpu_custom_call.1} parent=11 // pred_check
          %p448 = pneg %p204
        $region38: #{tpu_custom_call.1} parent=11 // pred_check_branch
          %450 = sbr.rel (%p448) target = $region40
        $region39: #{tpu_custom_call.1} parent=11 // pred_region
          %s452 = ssub.s32 1024, 1024
          %453 = vsyncadd [#allocation12], %s452
          %s454 = sshll.u32 [#allocation11], 4
          %s455 = int_to_ptr.vmem [resolvable:$true] %s454
          %460 = dma.hbm_to_vmem [thread:$0]  %s7, 1024, %s455, [#allocation12], 64, 64, 4
        $region40: #{tpu_custom_call.1} parent=11 // pred_fallthru
          _
        // Predicated region
        $region41: #{tpu_custom_call.1} parent=11 // pred_check
          %p461 = pneg %p225
        $region42: #{tpu_custom_call.1} parent=11 // pred_check_branch
          %463 = sbr.rel (%p461) target = $region44
        $region43: #{tpu_custom_call.1} parent=11 // pred_region
          _
        $region44: #{tpu_custom_call.1} parent=11 // pred_fallthru
          _
        // Predicated region
        $region45: #{tpu_custom_call.1} parent=11 // pred_check
          %p464 = pneg %p246
        $region46: #{tpu_custom_call.1} parent=11 // pred_check_branch
          %466 = sbr.rel (%p464) target = $region48
        $region47: #{tpu_custom_call.1} parent=11 // pred_region
          %s468 = ssub.s32 1024, 1024
          %469 = vsyncadd [#allocation12], %s468
          %s470 = sshll.u32 [#allocation13], 4
          %s471 = int_to_ptr.vmem [resolvable:$true] %s470
          %476 = dma.hbm_to_vmem [thread:$0]  %s9, 1024, %s471, [#allocation12], 64, 64, 4
        $region48: #{tpu_custom_call.1} parent=11 // pred_fallthru
          _
        // Predicated region
        $region49: #{tpu_custom_call.1} parent=11 // pred_check
          %p477 = pneg %p267
        $region50: #{tpu_custom_call.1} parent=11 // pred_check_branch
          %479 = sbr.rel (%p477) target = $region52
        $region51: #{tpu_custom_call.1} parent=11 // pred_region
          _
        $region52: #{tpu_custom_call.1} parent=11 // pred_fallthru
          _
        // Predicated region
        $region53: #{tpu_custom_call.1} parent=11 // pred_check
          %p480 = pneg %p288
        $region54: #{tpu_custom_call.1} parent=11 // pred_check_branch
          %482 = sbr.rel (%p480) target = $region56
        $region55: #{tpu_custom_call.1} parent=11 // pred_region
          %s484 = ssub.s32 1024, 1024
          %485 = vsyncadd [#allocation15], %s484
          %s486 = sshll.u32 [#allocation14], 4
          %s487 = int_to_ptr.vmem [resolvable:$true] %s486
          %492 = dma.hbm_to_vmem [thread:$0]  %s11, 1024, %s487, [#allocation15], 64, 64, 4
        $region56: #{tpu_custom_call.1} parent=11 // pred_fallthru
          _
        // Predicated region
        $region57: #{tpu_custom_call.1} parent=11 // pred_check
          %p493 = pneg %p309
        $region58: #{tpu_custom_call.1} parent=11 // pred_check_branch
          %495 = sbr.rel (%p493) target = $region60
        $region59: #{tpu_custom_call.1} parent=11 // pred_region
          _
        $region60: #{tpu_custom_call.1} parent=11 // pred_fallthru
          _
        // Predicated region
        $region61: #{tpu_custom_call.1} parent=11 // pred_check
          %p496 = pneg %p330
        $region62: #{tpu_custom_call.1} parent=11 // pred_check_branch
          %498 = sbr.rel (%p496) target = $region64
        $region63: #{tpu_custom_call.1} parent=11 // pred_region
          %s500 = ssub.s32 1024, 1024
          %501 = vsyncadd [#allocation15], %s500
          %s502 = sshll.u32 [#allocation16], 4
          %s503 = int_to_ptr.vmem [resolvable:$true] %s502
          %508 = dma.hbm_to_vmem [thread:$0]  %s13, 1024, %s503, [#allocation15], 64, 64, 4
        $region64: #{tpu_custom_call.1} parent=11 // pred_fallthru
          _
        // Predicated region
        $region65: #{tpu_custom_call.1} parent=11 // pred_check
          %p509 = pneg %p351
        $region66: #{tpu_custom_call.1} parent=11 // pred_check_branch
          %511 = sbr.rel (%p509) target = $region68
        $region67: #{tpu_custom_call.1} parent=11 // pred_region
          _
        $region68: #{tpu_custom_call.1} parent=11 // pred_fallthru
          _
      $region12: #{tpu_custom_call.1} parent=5 // pred_fallthru
        _
      %p512 = scmp.lt.s32.totalorder %s31, 2
      // Predicated region
      $region69: #{tpu_custom_call.1} parent=5 // pred_check
        %p513 = pneg %p512
      $region70: #{tpu_custom_call.1} parent=5 // pred_check_branch
        %515 = sbr.rel (%p513) target = $region72
      $region71: #{tpu_custom_call.1} parent=5 // pred_region
        // Predicated region
        $region73: #{tpu_custom_call.1} parent=71 // pred_check
          %p516 = pneg %p51
        $region74: #{tpu_custom_call.1} parent=71 // pred_check_branch
          %518 = sbr.rel (%p516) target = $region76
        $region75: #{tpu_custom_call.1} parent=71 // pred_region
          %s519 = sand.u32 %s41, 1
          %s520 = scalar_lea.sflag [#allocation3], %s519
          %s521 = sand.u32 %s41, 1
          %s522 = smul.addr %s521, 4
          %s523 = scalar_lea.vmem [#allocation2], %s522
          %s525 = ssub.s32 64, 64
          %526 = vsyncadd %s520, %s525
          %s527 = smul.addr %s31, 64
          %s528 = scalar_lea.hbm %s0, %s527
          %s530 = sshll.u32 %s523, 4
          %s531 = int_to_ptr.vmem [resolvable:$true] %s530
          %533 = dma.hbm_to_vmem [thread:$0]  %s528, 64, %s531, %s520
        $region76: #{tpu_custom_call.1} parent=71 // pred_fallthru
          _
      $region72: #{tpu_custom_call.1} parent=5 // pred_fallthru
        _
      %p534 = scmp.le.s32.totalorder 1, %s31
      %p535 = scmp.lt.s32.totalorder %s31, 3
      %p536 = pnand %p534, %p535
      %p537 = pneg %p536
      // Predicated region
      $region77: #{tpu_custom_call.1} parent=5 // pred_check
        _
      $region78: #{tpu_custom_call.1} parent=5 // pred_check_branch
        %539 = sbr.rel (%p536) target = $region80
      $region79: #{tpu_custom_call.1} parent=5 // pred_region
        %s540 = ssub.s32 %s31, 1
        %s541 = sand.u32 %s44, 1
        %s542 = scalar_lea.sflag [#allocation3], %s541
        %s543 = sand.u32 %s44, 1
        %s544 = smul.addr %s543, 4
        %s545 = scalar_lea.vmem [#allocation2], %s544
        // Predicated region
        $region81: #{tpu_custom_call.1} parent=79 // pred_check
          %p546 = pneg %p57
        $region82: #{tpu_custom_call.1} parent=79 // pred_check_branch
          %548 = sbr.rel (%p546) target = $region84
        $region83: #{tpu_custom_call.1} parent=79 // pred_region
          %549 = dma.done %s542, 64
        $region84: #{tpu_custom_call.1} parent=79 // pred_fallthru
          _
        // Predicated region
        $region85: #{tpu_custom_call.1} parent=79 // pred_check
          %p550 = pneg %p78
        $region86: #{tpu_custom_call.1} parent=79 // pred_check_branch
          %552 = sbr.rel (%p550) target = $region88
        $region87: #{tpu_custom_call.1} parent=79 // pred_region
          %553 = dma.done [#allocation6], 4096
        $region88: #{tpu_custom_call.1} parent=79 // pred_fallthru
          _
        // Predicated region
        $region89: #{tpu_custom_call.1} parent=79 // pred_check
          %p554 = pneg %p99
        $region90: #{tpu_custom_call.1} parent=79 // pred_check_branch
          %556 = sbr.rel (%p554) target = $region92
        $region91: #{tpu_custom_call.1} parent=79 // pred_region
          %557 = dma.done [#allocation6], 64
        $region92: #{tpu_custom_call.1} parent=79 // pred_fallthru
          _
        // Predicated region
        $region93: #{tpu_custom_call.1} parent=79 // pred_check
          %p558 = pneg %p120
        $region94: #{tpu_custom_call.1} parent=79 // pred_check_branch
          %560 = sbr.rel (%p558) target = $region96
        $region95: #{tpu_custom_call.1} parent=79 // pred_region
          %561 = dma.done [#allocation9], 8192
        $region96: #{tpu_custom_call.1} parent=79 // pred_fallthru
          _
        // Predicated region
        $region97: #{tpu_custom_call.1} parent=79 // pred_check
          %p562 = pneg %p162
        $region98: #{tpu_custom_call.1} parent=79 // pred_check_branch
          %564 = sbr.rel (%p562) target = $region100
        $region99: #{tpu_custom_call.1} parent=79 // pred_region
          %565 = dma.done [#allocation9], 2048
        $region100: #{tpu_custom_call.1} parent=79 // pred_fallthru
          _
        // Predicated region
        $region101: #{tpu_custom_call.1} parent=79 // pred_check
          %p566 = pneg %p204
        $region102: #{tpu_custom_call.1} parent=79 // pred_check_branch
          %568 = sbr.rel (%p566) target = $region104
        $region103: #{tpu_custom_call.1} parent=79 // pred_region
          %569 = dma.done [#allocation12], 1024
        $region104: #{tpu_custom_call.1} parent=79 // pred_fallthru
          _
        // Predicated region
        $region105: #{tpu_custom_call.1} parent=79 // pred_check
          %p570 = pneg %p246
        $region106: #{tpu_custom_call.1} parent=79 // pred_check_branch
          %572 = sbr.rel (%p570) target = $region108
        $region107: #{tpu_custom_call.1} parent=79 // pred_region
          %573 = dma.done [#allocation12], 1024
        $region108: #{tpu_custom_call.1} parent=79 // pred_fallthru
          _
        // Predicated region
        $region109: #{tpu_custom_call.1} parent=79 // pred_check
          %p574 = pneg %p288
        $region110: #{tpu_custom_call.1} parent=79 // pred_check_branch
          %576 = sbr.rel (%p574) target = $region112
        $region111: #{tpu_custom_call.1} parent=79 // pred_region
          %577 = dma.done [#allocation15], 1024
        $region112: #{tpu_custom_call.1} parent=79 // pred_fallthru
          _
        // Predicated region
        $region113: #{tpu_custom_call.1} parent=79 // pred_check
          %p578 = pneg %p330
        $region114: #{tpu_custom_call.1} parent=79 // pred_check_branch
          %580 = sbr.rel (%p578) target = $region116
        $region115: #{tpu_custom_call.1} parent=79 // pred_region
          %581 = dma.done [#allocation15], 1024
        $region116: #{tpu_custom_call.1} parent=79 // pred_fallthru
          _
        %s582 = sand.u32 %s44, 1
        %s583 = scalar_lea.sflag [#allocation3], %s582
        %s584 = sand.u32 %s44, 1
        %s585 = smul.addr %s584, 4
        %s586 = scalar_lea.vmem [#allocation2], %s585
        %p587 = pneg %p57
        %p588 = pneg %p54
        %p589 = pneg %p78
        %p590 = pneg %p75
        %p591 = pneg %p99
        %p592 = pneg %p96
        %p593 = pneg %p120
        %p594 = pneg %p117
        %p595 = pneg %p141
        %p596 = pneg %p138
        %p597 = pneg %p162
        %p598 = pneg %p159
        %p599 = pneg %p183
        %p600 = pneg %p180
        %p601 = pneg %p204
        %p602 = pneg %p201
        %p603 = pneg %p225
        %p604 = pneg %p222
        %p605 = pneg %p246
        %p606 = pneg %p243
        %p607 = pneg %p267
        %p608 = pneg %p264
        %p609 = pneg %p288
        %p610 = pneg %p285
        %p611 = pneg %p309
        %p612 = pneg %p306
        %p613 = pneg %p330
        %p614 = pneg %p327
        %p615 = pneg %p351
        %p616 = pneg %p348
        %p617 = pneg %p377
        %p618 = pneg %p374
        %s619 = sand.u32 %s364, 1
        %s620 = scalar_lea.sflag [#allocation4], %s619
        %s621 = sand.u32 %s364, 1
        %s622 = scalar_lea.vmem [#allocation17], %s621
        %v624 = vld [vmem:[%s545] sm:$0xf]
        %v625 = vld [vmem:[#allocation5] sm:$0xff]
        %v626 = vld [vmem:[#allocation5 + $0x8] sm:$0xff]
        %v627 = vld [vmem:[#allocation5 + $0x10] sm:$0xff]
        %v628 = vld [vmem:[#allocation5 + $0x18] sm:$0xff]
        %v629 = vld [vmem:[#allocation5 + $0x20] sm:$0xff]
        %v630 = vld [vmem:[#allocation5 + $0x28] sm:$0xff]
        %v631 = vld [vmem:[#allocation5 + $0x30] sm:$0xff]
        %v632 = vld [vmem:[#allocation5 + $0x38] sm:$0xff]
        %v633 = vld [vmem:[#allocation5 + $0x40] sm:$0xff]
        %v634 = vld [vmem:[#allocation5 + $0x48] sm:$0xff]
        %v635 = vld [vmem:[#allocation5 + $0x50] sm:$0xff]
        %v636 = vld [vmem:[#allocation5 + $0x58] sm:$0xff]
        %v637 = vld [vmem:[#allocation5 + $0x60] sm:$0xff]
        %v638 = vld [vmem:[#allocation5 + $0x68] sm:$0xff]
        %v639 = vld [vmem:[#allocation5 + $0x70] sm:$0xff]
        %v640 = vld [vmem:[#allocation5 + $0x78] sm:$0xff]
        %v641 = vld [vmem:[#allocation5 + $0x80] sm:$0xff]
        %v642 = vld [vmem:[#allocation5 + $0x88] sm:$0xff]
        %v643 = vld [vmem:[#allocation5 + $0x90] sm:$0xff]
        %v644 = vld [vmem:[#allocation5 + $0x98] sm:$0xff]
        %v645 = vld [vmem:[#allocation5 + $0xa0] sm:$0xff]
        %v646 = vld [vmem:[#allocation5 + $0xa8] sm:$0xff]
        %v647 = vld [vmem:[#allocation5 + $0xb0] sm:$0xff]
        %v648 = vld [vmem:[#allocation5 + $0xb8] sm:$0xff]
        %v649 = vld [vmem:[#allocation5 + $0xc0] sm:$0xff]
        %v650 = vld [vmem:[#allocation5 + $0xc8] sm:$0xff]
        %v651 = vld [vmem:[#allocation5 + $0xd0] sm:$0xff]
        %v652 = vld [vmem:[#allocation5 + $0xd8] sm:$0xff]
        %v653 = vld [vmem:[#allocation5 + $0xe0] sm:$0xff]
        %v654 = vld [vmem:[#allocation5 + $0xe8] sm:$0xff]
        %v655 = vld [vmem:[#allocation5 + $0xf0] sm:$0xff]
        %v656 = vld [vmem:[#allocation5 + $0xf8] sm:$0xff]
        %v657 = vld [vmem:[#allocation7] sm:$0xf]
        %v659 = vlaneseq
        %v660 = vshrl.u32 %v659, 7
        %v661 = vsub.s32 0, %v660
        %v662 = vrot.slane %v657, %v661
        %v663 = vlaneseq
        %v664 = vshrl.u32 %v663, 7
        %v665 = vsub.s32 1, %v664
        %v666 = vrot.slane %v657, %v665
        %v667 = vlaneseq
        %v668 = vshrl.u32 %v667, 7
        %v669 = vsub.s32 2, %v668
        %v670 = vrot.slane %v657, %v669
        %v671 = vlaneseq
        %v672 = vshrl.u32 %v671, 7
        %v673 = vsub.s32 3, %v672
        %v674 = vrot.slane %v657, %v673
        %v711 = vunpack.c.l.b16 %v625
        %v712 = vunpack.c.h.b16 %v625
        %v713 = vunpack.c.l.b16 %v626
        %v714 = vunpack.c.h.b16 %v626
        %v715 = vunpack.c.l.b16 %v627
        %v716 = vunpack.c.h.b16 %v627
        %v717 = vunpack.c.l.b16 %v628
        %v718 = vunpack.c.h.b16 %v628
        %v719 = vunpack.c.l.b16 %v629
        %v720 = vunpack.c.h.b16 %v629
        %v721 = vunpack.c.l.b16 %v630
        %v722 = vunpack.c.h.b16 %v630
        %v723 = vunpack.c.l.b16 %v631
        %v724 = vunpack.c.h.b16 %v631
        %v725 = vunpack.c.l.b16 %v632
        %v726 = vunpack.c.h.b16 %v632
        %v727 = vunpack.c.l.b16 %v633
        %v728 = vunpack.c.h.b16 %v633
        %v729 = vunpack.c.l.b16 %v634
        %v730 = vunpack.c.h.b16 %v634
        %v731 = vunpack.c.l.b16 %v635
        %v732 = vunpack.c.h.b16 %v635
        %v733 = vunpack.c.l.b16 %v636
        %v734 = vunpack.c.h.b16 %v636
        %v735 = vunpack.c.l.b16 %v637
        %v736 = vunpack.c.h.b16 %v637
        %v737 = vunpack.c.l.b16 %v638
        %v738 = vunpack.c.h.b16 %v638
        %v739 = vunpack.c.l.b16 %v639
        %v740 = vunpack.c.h.b16 %v639
        %v741 = vunpack.c.l.b16 %v640
        %v742 = vunpack.c.h.b16 %v640
        %v743 = vunpack.c.l.b16 %v641
        %v744 = vunpack.c.h.b16 %v641
        %v745 = vunpack.c.l.b16 %v642
        %v746 = vunpack.c.h.b16 %v642
        %v747 = vunpack.c.l.b16 %v643
        %v748 = vunpack.c.h.b16 %v643
        %v749 = vunpack.c.l.b16 %v644
        %v750 = vunpack.c.h.b16 %v644
        %v751 = vunpack.c.l.b16 %v645
        %v752 = vunpack.c.h.b16 %v645
        %v753 = vunpack.c.l.b16 %v646
        %v754 = vunpack.c.h.b16 %v646
        %v755 = vunpack.c.l.b16 %v647
        %v756 = vunpack.c.h.b16 %v647
        %v757 = vunpack.c.l.b16 %v648
        %v758 = vunpack.c.h.b16 %v648
        %v759 = vunpack.c.l.b16 %v649
        %v760 = vunpack.c.h.b16 %v649
        %v761 = vunpack.c.l.b16 %v650
        %v762 = vunpack.c.h.b16 %v650
        %v763 = vunpack.c.l.b16 %v651
        %v764 = vunpack.c.h.b16 %v651
        %v765 = vunpack.c.l.b16 %v652
        %v766 = vunpack.c.h.b16 %v652
        %v767 = vunpack.c.l.b16 %v653
        %v768 = vunpack.c.h.b16 %v653
        %v769 = vunpack.c.l.b16 %v654
        %v770 = vunpack.c.h.b16 %v654
        %v771 = vunpack.c.l.b16 %v655
        %v772 = vunpack.c.h.b16 %v655
        %v773 = vunpack.c.l.b16 %v656
        %v774 = vunpack.c.h.b16 %v656
        %v775 = vpack.c.b16 %v715, %v711
        %v776 = vpack.c.b16 %v716, %v712
        %v777 = vpack.c.b16 %v717, %v713
        %v778 = vpack.c.b16 %v718, %v714
        %v779 = vpack.c.b16 %v723, %v719
        %v780 = vpack.c.b16 %v724, %v720
        %v781 = vpack.c.b16 %v725, %v721
        %v782 = vpack.c.b16 %v726, %v722
        %v783 = vpack.c.b16 %v731, %v727
        %v784 = vpack.c.b16 %v732, %v728
        %v785 = vpack.c.b16 %v733, %v729
        %v786 = vpack.c.b16 %v734, %v730
        %v787 = vpack.c.b16 %v739, %v735
        %v788 = vpack.c.b16 %v740, %v736
        %v789 = vpack.c.b16 %v741, %v737
        %v790 = vpack.c.b16 %v742, %v738
        %v791 = vpack.c.b16 %v747, %v743
        %v792 = vpack.c.b16 %v748, %v744
        %v793 = vpack.c.b16 %v749, %v745
        %v794 = vpack.c.b16 %v750, %v746
        %v795 = vpack.c.b16 %v755, %v751
        %v796 = vpack.c.b16 %v756, %v752
        %v797 = vpack.c.b16 %v757, %v753
        %v798 = vpack.c.b16 %v758, %v754
        %v799 = vpack.c.b16 %v763, %v759
        %v800 = vpack.c.b16 %v764, %v760
        %v801 = vpack.c.b16 %v765, %v761
        %v802 = vpack.c.b16 %v766, %v762
        %v803 = vpack.c.b16 %v771, %v767
        %v804 = vpack.c.b16 %v772, %v768
        %v805 = vpack.c.b16 %v773, %v769
        %v806 = vpack.c.b16 %v774, %v770
        %839 = vmatprep.subr.bf16.mxu0 %v804
        %840 = vmatpush1.bf16.msra.mxu0 %v803
        %841 = vmatprep.subr.bf16.mxu0 %v800
        %842 = vmatpush1.bf16.msra.mxu0 %v799
        %843 = vmatprep.subr.bf16.mxu0 %v796
        %844 = vmatpush1.bf16.msra.mxu0 %v795
        %845 = vmatprep.subr.bf16.mxu0 %v792
        %846 = vmatpush1.bf16.msra.mxu0 %v791
        %847 = vmatprep.subr.bf16.mxu0 %v788
        %848 = vmatpush1.bf16.msra.mxu0 %v787
        %849 = vmatprep.subr.bf16.mxu0 %v784
        %850 = vmatpush1.bf16.msra.mxu0 %v783
        %851 = vmatprep.subr.bf16.mxu0 %v780
        %852 = vmatpush1.bf16.msra.mxu0 %v779
        %853 = vmatprep.subr.bf16.mxu0 %v776
        %854 = vmatpush1.bf16.msra.mxu0 %v775
        %855 = vmatprep.subr.bf16.mxu0 0
        %856 = vmatpush2.bf16.msra.mxu0 0
        %857 = vmatprep.subr.bf16.mxu0 0
        %858 = vmatpush2.bf16.msra.mxu0 0
        %859 = vmatprep.subr.bf16.mxu0 0
        %860 = vmatpush2.bf16.msra.mxu0 0
        %861 = vmatprep.subr.bf16.mxu0 0
        %862 = vmatpush2.bf16.msra.mxu0 0
        %863 = vmatprep.subr.bf16.mxu0 0
        %864 = vmatpush2.bf16.msra.mxu0 0
        %865 = vmatprep.subr.bf16.mxu0 0
        %866 = vmatpush2.bf16.msra.mxu0 0
        %867 = vmatprep.subr.bf16.mxu0 0
        %868 = vmatpush2.bf16.msra.mxu0 0
        %869 = vmatprep.subr.bf16.mxu0 0
        %870 = vmatpush2.bf16.msra.mxu0 0
        %871 = vmatprep.mubr.bf16.mxu0 0
        %872 = vmatmul.mubr.bf16.gmra.mxu0 %v624
        %v873 = vpop.f32.mrf.mxu0
        %v874 = vadd.f32 %v662, %v873
        %v875 = vpop.f32.mrf.mxu0
        %v876 = vadd.f32 %v666, %v875
        %v877 = vpop.f32.mrf.mxu0
        %v878 = vpop.f32.mrf.mxu0
        %879 = vdwg.mxu0
        %880 = vmatprep.subr.bf16.mxu0 %v806
        %881 = vmatpush1.bf16.msra.mxu0 %v805
        %882 = vmatprep.subr.bf16.mxu0 %v802
        %883 = vmatpush1.bf16.msra.mxu0 %v801
        %884 = vmatprep.subr.bf16.mxu0 %v798
        %885 = vmatpush1.bf16.msra.mxu0 %v797
        %886 = vmatprep.subr.bf16.mxu0 %v794
        %887 = vmatpush1.bf16.msra.mxu0 %v793
        %888 = vmatprep.subr.bf16.mxu0 %v790
        %889 = vmatpush1.bf16.msra.mxu0 %v789
        %890 = vmatprep.subr.bf16.mxu0 %v786
        %891 = vmatpush1.bf16.msra.mxu0 %v785
        %892 = vmatprep.subr.bf16.mxu0 %v782
        %893 = vmatpush1.bf16.msra.mxu0 %v781
        %894 = vmatprep.subr.bf16.mxu0 %v778
        %895 = vmatpush1.bf16.msra.mxu0 %v777
        %896 = vmatprep.subr.bf16.mxu0 0
        %897 = vmatpush2.bf16.msra.mxu0 0
        %898 = vmatprep.subr.bf16.mxu0 0
        %899 = vmatpush2.bf16.msra.mxu0 0
        %900 = vmatprep.subr.bf16.mxu0 0
        %901 = vmatpush2.bf16.msra.mxu0 0
        %902 = vmatprep.subr.bf16.mxu0 0
        %903 = vmatpush2.bf16.msra.mxu0 0
        %904 = vmatprep.subr.bf16.mxu0 0
        %905 = vmatpush2.bf16.msra.mxu0 0
        %906 = vmatprep.subr.bf16.mxu0 0
        %907 = vmatpush2.bf16.msra.mxu0 0
        %908 = vmatprep.subr.bf16.mxu0 0
        %909 = vmatpush2.bf16.msra.mxu0 0
        %910 = vmatprep.subr.bf16.mxu0 0
        %911 = vmatpush2.bf16.msra.mxu0 0
        %912 = vmatprep.mubr.bf16.mxu0 0
        %913 = vmatmul.mubr.bf16.gmra.mxu0 %v624
        %v914 = vpop.f32.mrf.mxu0
        %v915 = vadd.f32 %v670, %v914
        %v916 = vpop.f32.mrf.mxu0
        %v917 = vadd.f32 %v674, %v916
        %v918 = vpop.f32.mrf.mxu0
        %v919 = vpop.f32.mrf.mxu0
        %920 = vdwg.mxu0
        %v921 = vmax.f32 %v874, 0.0
        %v922 = vmax.f32 %v876, 0.0
        %v923 = vmax.f32 %v915, 0.0
        %v924 = vmax.f32 %v917, 0.0
        %v925 = vpack.c.bf16 %v921, %v921
        %v926 = vpack.c.bf16 %v922, %v922
        %v927 = vpack.c.bf16 %v923, %v923
        %v928 = vpack.c.bf16 %v924, %v924
        %v929 = vld [vmem:[#allocation8] sm:$0xff]
        %v930 = vld [vmem:[#allocation8 + $0x8] sm:$0xff]
        %v931 = vld [vmem:[#allocation8 + $0x10] sm:$0xff]
        %v932 = vld [vmem:[#allocation8 + $0x18] sm:$0xff]
        %v933 = vld [vmem:[#allocation8 + $0x20] sm:$0xff]
        %v934 = vld [vmem:[#allocation8 + $0x28] sm:$0xff]
        %v935 = vld [vmem:[#allocation8 + $0x30] sm:$0xff]
        %v936 = vld [vmem:[#allocation8 + $0x38] sm:$0xff]
        %v937 = vld [vmem:[#allocation8 + $0x40] sm:$0xff]
        %v938 = vld [vmem:[#allocation8 + $0x48] sm:$0xff]
        %v939 = vld [vmem:[#allocation8 + $0x50] sm:$0xff]
        %v940 = vld [vmem:[#allocation8 + $0x58] sm:$0xff]
        %v941 = vld [vmem:[#allocation8 + $0x60] sm:$0xff]
        %v942 = vld [vmem:[#allocation8 + $0x68] sm:$0xff]
        %v943 = vld [vmem:[#allocation8 + $0x70] sm:$0xff]
        %v944 = vld [vmem:[#allocation8 + $0x78] sm:$0xff]
        %v945 = vld [vmem:[#allocation8 + $0x80] sm:$0xff]
        %v946 = vld [vmem:[#allocation8 + $0x88] sm:$0xff]
        %v947 = vld [vmem:[#allocation8 + $0x90] sm:$0xff]
        %v948 = vld [vmem:[#allocation8 + $0x98] sm:$0xff]
        %v949 = vld [vmem:[#allocation8 + $0xa0] sm:$0xff]
        %v950 = vld [vmem:[#allocation8 + $0xa8] sm:$0xff]
        %v951 = vld [vmem:[#allocation8 + $0xb0] sm:$0xff]
        %v952 = vld [vmem:[#allocation8 + $0xb8] sm:$0xff]
        %v953 = vld [vmem:[#allocation8 + $0xc0] sm:$0xff]
        %v954 = vld [vmem:[#allocation8 + $0xc8] sm:$0xff]
        %v955 = vld [vmem:[#allocation8 + $0xd0] sm:$0xff]
        %v956 = vld [vmem:[#allocation8 + $0xd8] sm:$0xff]
        %v957 = vld [vmem:[#allocation8 + $0xe0] sm:$0xff]
        %v958 = vld [vmem:[#allocation8 + $0xe8] sm:$0xff]
        %v959 = vld [vmem:[#allocation8 + $0xf0] sm:$0xff]
        %v960 = vld [vmem:[#allocation8 + $0xf8] sm:$0xff]
        %v961 = vld [vmem:[#allocation8 + $0x100] sm:$0xff]
        %v962 = vld [vmem:[#allocation8 + $0x108] sm:$0xff]
        %v963 = vld [vmem:[#allocation8 + $0x110] sm:$0xff]
        %v964 = vld [vmem:[#allocation8 + $0x118] sm:$0xff]
        %v965 = vld [vmem:[#allocation8 + $0x120] sm:$0xff]
        %v966 = vld [vmem:[#allocation8 + $0x128] sm:$0xff]
        %v967 = vld [vmem:[#allocation8 + $0x130] sm:$0xff]
        %v968 = vld [vmem:[#allocation8 + $0x138] sm:$0xff]
        %v969 = vld [vmem:[#allocation8 + $0x140] sm:$0xff]
        %v970 = vld [vmem:[#allocation8 + $0x148] sm:$0xff]
        %v971 = vld [vmem:[#allocation8 + $0x150] sm:$0xff]
        %v972 = vld [vmem:[#allocation8 + $0x158] sm:$0xff]
        %v973 = vld [vmem:[#allocation8 + $0x160] sm:$0xff]
        %v974 = vld [vmem:[#allocation8 + $0x168] sm:$0xff]
        %v975 = vld [vmem:[#allocation8 + $0x170] sm:$0xff]
        %v976 = vld [vmem:[#allocation8 + $0x178] sm:$0xff]
        %v977 = vld [vmem:[#allocation8 + $0x180] sm:$0xff]
        %v978 = vld [vmem:[#allocation8 + $0x188] sm:$0xff]
        %v979 = vld [vmem:[#allocation8 + $0x190] sm:$0xff]
        %v980 = vld [vmem:[#allocation8 + $0x198] sm:$0xff]
        %v981 = vld [vmem:[#allocation8 + $0x1a0] sm:$0xff]
        %v982 = vld [vmem:[#allocation8 + $0x1a8] sm:$0xff]
        %v983 = vld [vmem:[#allocation8 + $0x1b0] sm:$0xff]
        %v984 = vld [vmem:[#allocation8 + $0x1b8] sm:$0xff]
        %v985 = vld [vmem:[#allocation8 + $0x1c0] sm:$0xff]
        %v986 = vld [vmem:[#allocation8 + $0x1c8] sm:$0xff]
        %v987 = vld [vmem:[#allocation8 + $0x1d0] sm:$0xff]
        %v988 = vld [vmem:[#allocation8 + $0x1d8] sm:$0xff]
        %v989 = vld [vmem:[#allocation8 + $0x1e0] sm:$0xff]
        %v990 = vld [vmem:[#allocation8 + $0x1e8] sm:$0xff]
        %v991 = vld [vmem:[#allocation8 + $0x1f0] sm:$0xff]
        %v992 = vld [vmem:[#allocation8 + $0x1f8] sm:$0xff]
        %v993 = vld [vmem:[%s4] sm:$0x3]
        %v995 = vlaneseq
        %v996 = vshrl.u32 %v995, 7
        %v997 = vsub.s32 0, %v996
        %v998 = vrot.slane %v993, %v997
        %v999 = vlaneseq
        %v1000 = vshrl.u32 %v999, 7
        %v1001 = vsub.s32 1, %v1000
        %v1002 = vrot.slane %v993, %v1001
        %v1069 = vunpack.c.l.b16 %v929
        %v1070 = vunpack.c.h.b16 %v929
        %v1071 = vunpack.c.l.b16 %v930
        %v1072 = vunpack.c.h.b16 %v930
        %v1073 = vunpack.c.l.b16 %v931
        %v1074 = vunpack.c.h.b16 %v931
        %v1075 = vunpack.c.l.b16 %v932
        %v1076 = vunpack.c.h.b16 %v932
        %v1077 = vunpack.c.l.b16 %v933
        %v1078 = vunpack.c.h.b16 %v933
        %v1079 = vunpack.c.l.b16 %v934
        %v1080 = vunpack.c.h.b16 %v934
        %v1081 = vunpack.c.l.b16 %v935
        %v1082 = vunpack.c.h.b16 %v935
        %v1083 = vunpack.c.l.b16 %v936
        %v1084 = vunpack.c.h.b16 %v936
        %v1085 = vunpack.c.l.b16 %v937
        %v1086 = vunpack.c.h.b16 %v937
        %v1087 = vunpack.c.l.b16 %v938
        %v1088 = vunpack.c.h.b16 %v938
        %v1089 = vunpack.c.l.b16 %v939
        %v1090 = vunpack.c.h.b16 %v939
        %v1091 = vunpack.c.l.b16 %v940
        %v1092 = vunpack.c.h.b16 %v940
        %v1093 = vunpack.c.l.b16 %v941
        %v1094 = vunpack.c.h.b16 %v941
        %v1095 = vunpack.c.l.b16 %v942
        %v1096 = vunpack.c.h.b16 %v942
        %v1097 = vunpack.c.l.b16 %v943
        %v1098 = vunpack.c.h.b16 %v943
        %v1099 = vunpack.c.l.b16 %v944
        %v1100 = vunpack.c.h.b16 %v944
        %v1101 = vunpack.c.l.b16 %v945
        %v1102 = vunpack.c.h.b16 %v945
        %v1103 = vunpack.c.l.b16 %v946
        %v1104 = vunpack.c.h.b16 %v946
        %v1105 = vunpack.c.l.b16 %v947
        %v1106 = vunpack.c.h.b16 %v947
        %v1107 = vunpack.c.l.b16 %v948
        %v1108 = vunpack.c.h.b16 %v948
        %v1109 = vunpack.c.l.b16 %v949
        %v1110 = vunpack.c.h.b16 %v949
        %v1111 = vunpack.c.l.b16 %v950
        %v1112 = vunpack.c.h.b16 %v950
        %v1113 = vunpack.c.l.b16 %v951
        %v1114 = vunpack.c.h.b16 %v951
        %v1115 = vunpack.c.l.b16 %v952
        %v1116 = vunpack.c.h.b16 %v952
        %v1117 = vunpack.c.l.b16 %v953
        %v1118 = vunpack.c.h.b16 %v953
        %v1119 = vunpack.c.l.b16 %v954
        %v1120 = vunpack.c.h.b16 %v954
        %v1121 = vunpack.c.l.b16 %v955
        %v1122 = vunpack.c.h.b16 %v955
        %v1123 = vunpack.c.l.b16 %v956
        %v1124 = vunpack.c.h.b16 %v956
        %v1125 = vunpack.c.l.b16 %v957
        %v1126 = vunpack.c.h.b16 %v957
        %v1127 = vunpack.c.l.b16 %v958
        %v1128 = vunpack.c.h.b16 %v958
        %v1129 = vunpack.c.l.b16 %v959
        %v1130 = vunpack.c.h.b16 %v959
        %v1131 = vunpack.c.l.b16 %v960
        %v1132 = vunpack.c.h.b16 %v960
        %v1133 = vunpack.c.l.b16 %v961
        %v1134 = vunpack.c.h.b16 %v961
        %v1135 = vunpack.c.l.b16 %v962
        %v1136 = vunpack.c.h.b16 %v962
        %v1137 = vunpack.c.l.b16 %v963
        %v1138 = vunpack.c.h.b16 %v963
        %v1139 = vunpack.c.l.b16 %v964
        %v1140 = vunpack.c.h.b16 %v964
        %v1141 = vunpack.c.l.b16 %v965
        %v1142 = vunpack.c.h.b16 %v965
        %v1143 = vunpack.c.l.b16 %v966
        %v1144 = vunpack.c.h.b16 %v966
        %v1145 = vunpack.c.l.b16 %v967
        %v1146 = vunpack.c.h.b16 %v967
        %v1147 = vunpack.c.l.b16 %v968
        %v1148 = vunpack.c.h.b16 %v968
        %v1149 = vunpack.c.l.b16 %v969
        %v1150 = vunpack.c.h.b16 %v969
        %v1151 = vunpack.c.l.b16 %v970
        %v1152 = vunpack.c.h.b16 %v970
        %v1153 = vunpack.c.l.b16 %v971
        %v1154 = vunpack.c.h.b16 %v971
        %v1155 = vunpack.c.l.b16 %v972
        %v1156 = vunpack.c.h.b16 %v972
        %v1157 = vunpack.c.l.b16 %v973
        %v1158 = vunpack.c.h.b16 %v973
        %v1159 = vunpack.c.l.b16 %v974
        %v1160 = vunpack.c.h.b16 %v974
        %v1161 = vunpack.c.l.b16 %v975
        %v1162 = vunpack.c.h.b16 %v975
        %v1163 = vunpack.c.l.b16 %v976
        %v1164 = vunpack.c.h.b16 %v976
        %v1165 = vunpack.c.l.b16 %v977
        %v1166 = vunpack.c.h.b16 %v977
        %v1167 = vunpack.c.l.b16 %v978
        %v1168 = vunpack.c.h.b16 %v978
        %v1169 = vunpack.c.l.b16 %v979
        %v1170 = vunpack.c.h.b16 %v979
        %v1171 = vunpack.c.l.b16 %v980
        %v1172 = vunpack.c.h.b16 %v980
        %v1173 = vunpack.c.l.b16 %v981
        %v1174 = vunpack.c.h.b16 %v981
        %v1175 = vunpack.c.l.b16 %v982
        %v1176 = vunpack.c.h.b16 %v982
        %v1177 = vunpack.c.l.b16 %v983
        %v1178 = vunpack.c.h.b16 %v983
        %v1179 = vunpack.c.l.b16 %v984
        %v1180 = vunpack.c.h.b16 %v984
        %v1181 = vunpack.c.l.b16 %v985
        %v1182 = vunpack.c.h.b16 %v985
        %v1183 = vunpack.c.l.b16 %v986
        %v1184 = vunpack.c.h.b16 %v986
        %v1185 = vunpack.c.l.b16 %v987
        %v1186 = vunpack.c.h.b16 %v987
        %v1187 = vunpack.c.l.b16 %v988
        %v1188 = vunpack.c.h.b16 %v988
        %v1189 = vunpack.c.l.b16 %v989
        %v1190 = vunpack.c.h.b16 %v989
        %v1191 = vunpack.c.l.b16 %v990
        %v1192 = vunpack.c.h.b16 %v990
        %v1193 = vunpack.c.l.b16 %v991
        %v1194 = vunpack.c.h.b16 %v991
        %v1195 = vunpack.c.l.b16 %v992
        %v1196 = vunpack.c.h.b16 %v992
        %v1197 = vpack.c.b16 %v1071, %v1069
        %v1198 = vpack.c.b16 %v1072, %v1070
        %v1199 = vpack.c.b16 %v1075, %v1073
        %v1200 = vpack.c.b16 %v1076, %v1074
        %v1201 = vpack.c.b16 %v1079, %v1077
        %v1202 = vpack.c.b16 %v1080, %v1078
        %v1203 = vpack.c.b16 %v1083, %v1081
        %v1204 = vpack.c.b16 %v1084, %v1082
        %v1205 = vpack.c.b16 %v1087, %v1085
        %v1206 = vpack.c.b16 %v1088, %v1086
        %v1207 = vpack.c.b16 %v1091, %v1089
        %v1208 = vpack.c.b16 %v1092, %v1090
        %v1209 = vpack.c.b16 %v1095, %v1093
        %v1210 = vpack.c.b16 %v1096, %v1094
        %v1211 = vpack.c.b16 %v1099, %v1097
        %v1212 = vpack.c.b16 %v1100, %v1098
        %v1213 = vpack.c.b16 %v1103, %v1101
        %v1214 = vpack.c.b16 %v1104, %v1102
        %v1215 = vpack.c.b16 %v1107, %v1105
        %v1216 = vpack.c.b16 %v1108, %v1106
        %v1217 = vpack.c.b16 %v1111, %v1109
        %v1218 = vpack.c.b16 %v1112, %v1110
        %v1219 = vpack.c.b16 %v1115, %v1113
        %v1220 = vpack.c.b16 %v1116, %v1114
        %v1221 = vpack.c.b16 %v1119, %v1117
        %v1222 = vpack.c.b16 %v1120, %v1118
        %v1223 = vpack.c.b16 %v1123, %v1121
        %v1224 = vpack.c.b16 %v1124, %v1122
        %v1225 = vpack.c.b16 %v1127, %v1125
        %v1226 = vpack.c.b16 %v1128, %v1126
        %v1227 = vpack.c.b16 %v1131, %v1129
        %v1228 = vpack.c.b16 %v1132, %v1130
        %v1229 = vpack.c.b16 %v1135, %v1133
        %v1230 = vpack.c.b16 %v1136, %v1134
        %v1231 = vpack.c.b16 %v1139, %v1137
        %v1232 = vpack.c.b16 %v1140, %v1138
        %v1233 = vpack.c.b16 %v1143, %v1141
        %v1234 = vpack.c.b16 %v1144, %v1142
        %v1235 = vpack.c.b16 %v1147, %v1145
        %v1236 = vpack.c.b16 %v1148, %v1146
        %v1237 = vpack.c.b16 %v1151, %v1149
        %v1238 = vpack.c.b16 %v1152, %v1150
        %v1239 = vpack.c.b16 %v1155, %v1153
        %v1240 = vpack.c.b16 %v1156, %v1154
        %v1241 = vpack.c.b16 %v1159, %v1157
        %v1242 = vpack.c.b16 %v1160, %v1158
        %v1243 = vpack.c.b16 %v1163, %v1161
        %v1244 = vpack.c.b16 %v1164, %v1162
        %v1245 = vpack.c.b16 %v1167, %v1165
        %v1246 = vpack.c.b16 %v1168, %v1166
        %v1247 = vpack.c.b16 %v1171, %v1169
        %v1248 = vpack.c.b16 %v1172, %v1170
        %v1249 = vpack.c.b16 %v1175, %v1173
        %v1250 = vpack.c.b16 %v1176, %v1174
        %v1251 = vpack.c.b16 %v1179, %v1177
        %v1252 = vpack.c.b16 %v1180, %v1178
        %v1253 = vpack.c.b16 %v1183, %v1181
        %v1254 = vpack.c.b16 %v1184, %v1182
        %v1255 = vpack.c.b16 %v1187, %v1185
        %v1256 = vpack.c.b16 %v1188, %v1186
        %v1257 = vpack.c.b16 %v1191, %v1189
        %v1258 = vpack.c.b16 %v1192, %v1190
        %v1259 = vpack.c.b16 %v1195, %v1193
        %v1260 = vpack.c.b16 %v1196, %v1194
        %1325 = vmatprep.subr.bf16.mxu0 %v1212
        %1326 = vmatpush1.bf16.msra.mxu0 %v1211
        %1327 = vmatprep.subr.bf16.mxu0 %v1210
        %1328 = vmatpush1.bf16.msra.mxu0 %v1209
        %1329 = vmatprep.subr.bf16.mxu0 %v1208
        %1330 = vmatpush1.bf16.msra.mxu0 %v1207
        %1331 = vmatprep.subr.bf16.mxu0 %v1206
        %1332 = vmatpush1.bf16.msra.mxu0 %v1205
        %1333 = vmatprep.subr.bf16.mxu0 %v1204
        %1334 = vmatpush1.bf16.msra.mxu0 %v1203
        %1335 = vmatprep.subr.bf16.mxu0 %v1202
        %1336 = vmatpush1.bf16.msra.mxu0 %v1201
        %1337 = vmatprep.subr.bf16.mxu0 %v1200
        %1338 = vmatpush1.bf16.msra.mxu0 %v1199
        %1339 = vmatprep.subr.bf16.mxu0 %v1198
        %1340 = vmatpush1.bf16.msra.mxu0 %v1197
        %1341 = vmatprep.subr.bf16.mxu0 %v1228
        %1342 = vmatpush2.bf16.msra.mxu0 %v1227
        %1343 = vmatprep.subr.bf16.mxu0 %v1226
        %1344 = vmatpush2.bf16.msra.mxu0 %v1225
        %1345 = vmatprep.subr.bf16.mxu0 %v1224
        %1346 = vmatpush2.bf16.msra.mxu0 %v1223
        %1347 = vmatprep.subr.bf16.mxu0 %v1222
        %1348 = vmatpush2.bf16.msra.mxu0 %v1221
        %1349 = vmatprep.subr.bf16.mxu0 %v1220
        %1350 = vmatpush2.bf16.msra.mxu0 %v1219
        %1351 = vmatprep.subr.bf16.mxu0 %v1218
        %1352 = vmatpush2.bf16.msra.mxu0 %v1217
        %1353 = vmatprep.subr.bf16.mxu0 %v1216
        %1354 = vmatpush2.bf16.msra.mxu0 %v1215
        %1355 = vmatprep.subr.bf16.mxu0 %v1214
        %1356 = vmatpush2.bf16.msra.mxu0 %v1213
        %1357 = vmatprep.mubr.bf16.mxu0 %v926
        %1358 = vmatmul.mubr.bf16.gmra.mxu0 %v925
        %v1359 = vpop.f32.mrf.mxu0
        %v1360 = vadd.f32 %v998, %v1359
        %v1361 = vpop.f32.mrf.mxu0
        %v1362 = vadd.f32 %v1002, %v1361
        %v1363 = vpop.f32.mrf.mxu0
        %v1364 = vpop.f32.mrf.mxu0
        %1365 = vdwg.mxu0
        %1366 = vmatprep.subr.bf16.mxu0 %v1244
        %1367 = vmatpush1.bf16.msra.mxu0 %v1243
        %1368 = vmatprep.subr.bf16.mxu0 %v1242
        %1369 = vmatpush1.bf16.msra.mxu0 %v1241
        %1370 = vmatprep.subr.bf16.mxu0 %v1240
        %1371 = vmatpush1.bf16.msra.mxu0 %v1239
        %1372 = vmatprep.subr.bf16.mxu0 %v1238
        %1373 = vmatpush1.bf16.msra.mxu0 %v1237
        %1374 = vmatprep.subr.bf16.mxu0 %v1236
        %1375 = vmatpush1.bf16.msra.mxu0 %v1235
        %1376 = vmatprep.subr.bf16.mxu0 %v1234
        %1377 = vmatpush1.bf16.msra.mxu0 %v1233
        %1378 = vmatprep.subr.bf16.mxu0 %v1232
        %1379 = vmatpush1.bf16.msra.mxu0 %v1231
        %1380 = vmatprep.subr.bf16.mxu0 %v1230
        %1381 = vmatpush1.bf16.msra.mxu0 %v1229
        %1382 = vmatprep.subr.bf16.mxu0 %v1260
        %1383 = vmatpush2.bf16.msra.mxu0 %v1259
        %1384 = vmatprep.subr.bf16.mxu0 %v1258
        %1385 = vmatpush2.bf16.msra.mxu0 %v1257
        %1386 = vmatprep.subr.bf16.mxu0 %v1256
        %1387 = vmatpush2.bf16.msra.mxu0 %v1255
        %1388 = vmatprep.subr.bf16.mxu0 %v1254
        %1389 = vmatpush2.bf16.msra.mxu0 %v1253
        %1390 = vmatprep.subr.bf16.mxu0 %v1252
        %1391 = vmatpush2.bf16.msra.mxu0 %v1251
        %1392 = vmatprep.subr.bf16.mxu0 %v1250
        %1393 = vmatpush2.bf16.msra.mxu0 %v1249
        %1394 = vmatprep.subr.bf16.mxu0 %v1248
        %1395 = vmatpush2.bf16.msra.mxu0 %v1247
        %1396 = vmatprep.subr.bf16.mxu0 %v1246
        %1397 = vmatpush2.bf16.msra.mxu0 %v1245
        %1398 = vmatprep.mubr.bf16.mxu0 %v928
        %1399 = vmatmul.mubr.bf16.gmra.mxu0 %v927
        %v1400 = vpop.f32.mrf.mxu0
        %v1401 = vadd.f32 %v1360, %v1400
        %v1402 = vpop.f32.mrf.mxu0
        %v1403 = vadd.f32 %v1362, %v1402
        %v1404 = vpop.f32.mrf.mxu0
        %v1405 = vpop.f32.mrf.mxu0
        %1406 = vdwg.mxu0
        %v1407 = vmax.f32 %v1401, 0.0
        %v1408 = vmax.f32 %v1403, 0.0
        %v1409 = vpack.c.bf16 %v1407, %v1407
        %v1410 = vpack.c.bf16 %v1408, %v1408
        %v1411 = vld [vmem:[#allocation10] sm:$0xf]
        %v1412 = vld [vmem:[#allocation10 + $0x4] sm:$0xf]
        %v1413 = vld [vmem:[#allocation10 + $0x8] sm:$0xf]
        %v1414 = vld [vmem:[#allocation10 + $0xc] sm:$0xf]
        %v1415 = vld [vmem:[#allocation10 + $0x10] sm:$0xf]
        %v1416 = vld [vmem:[#allocation10 + $0x14] sm:$0xf]
        %v1417 = vld [vmem:[#allocation10 + $0x18] sm:$0xf]
        %v1418 = vld [vmem:[#allocation10 + $0x1c] sm:$0xf]
        %v1419 = vld [vmem:[#allocation10 + $0x20] sm:$0xf]
        %v1420 = vld [vmem:[#allocation10 + $0x24] sm:$0xf]
        %v1421 = vld [vmem:[#allocation10 + $0x28] sm:$0xf]
        %v1422 = vld [vmem:[#allocation10 + $0x2c] sm:$0xf]
        %v1423 = vld [vmem:[#allocation10 + $0x30] sm:$0xf]
        %v1424 = vld [vmem:[#allocation10 + $0x34] sm:$0xf]
        %v1425 = vld [vmem:[#allocation10 + $0x38] sm:$0xf]
        %v1426 = vld [vmem:[#allocation10 + $0x3c] sm:$0xf]
        %v1427 = vld [vmem:[#allocation10 + $0x40] sm:$0xf]
        %v1428 = vld [vmem:[#allocation10 + $0x44] sm:$0xf]
        %v1429 = vld [vmem:[#allocation10 + $0x48] sm:$0xf]
        %v1430 = vld [vmem:[#allocation10 + $0x4c] sm:$0xf]
        %v1431 = vld [vmem:[#allocation10 + $0x50] sm:$0xf]
        %v1432 = vld [vmem:[#allocation10 + $0x54] sm:$0xf]
        %v1433 = vld [vmem:[#allocation10 + $0x58] sm:$0xf]
        %v1434 = vld [vmem:[#allocation10 + $0x5c] sm:$0xf]
        %v1435 = vld [vmem:[#allocation10 + $0x60] sm:$0xf]
        %v1436 = vld [vmem:[#allocation10 + $0x64] sm:$0xf]
        %v1437 = vld [vmem:[#allocation10 + $0x68] sm:$0xf]
        %v1438 = vld [vmem:[#allocation10 + $0x6c] sm:$0xf]
        %v1439 = vld [vmem:[#allocation10 + $0x70] sm:$0xf]
        %v1440 = vld [vmem:[#allocation10 + $0x74] sm:$0xf]
        %v1441 = vld [vmem:[#allocation10 + $0x78] sm:$0xf]
        %v1442 = vld [vmem:[#allocation10 + $0x7c] sm:$0xf]
        %v1443 = vld [vmem:[%s6] sm:$0x1]
        %v1445 = vlaneseq
        %v1446 = vshrl.u32 %v1445, 7
        %v1447 = vsub.s32 0, %v1446
        %v1448 = vrot.slane %v1443, %v1447
        %v1482 = vunpack.c.l.b16 %v1411
        %v1483 = vunpack.c.l.b16 %v1412
        %v1484 = vunpack.c.l.b16 %v1413
        %v1485 = vunpack.c.l.b16 %v1414
        %v1486 = vunpack.c.l.b16 %v1415
        %v1487 = vunpack.c.l.b16 %v1416
        %v1488 = vunpack.c.l.b16 %v1417
        %v1489 = vunpack.c.l.b16 %v1418
        %v1490 = vunpack.c.l.b16 %v1419
        %v1491 = vunpack.c.l.b16 %v1420
        %v1492 = vunpack.c.l.b16 %v1421
        %v1493 = vunpack.c.l.b16 %v1422
        %v1494 = vunpack.c.l.b16 %v1423
        %v1495 = vunpack.c.l.b16 %v1424
        %v1496 = vunpack.c.l.b16 %v1425
        %v1497 = vunpack.c.l.b16 %v1426
        %v1498 = vunpack.c.l.b16 %v1427
        %v1499 = vunpack.c.l.b16 %v1428
        %v1500 = vunpack.c.l.b16 %v1429
        %v1501 = vunpack.c.l.b16 %v1430
        %v1502 = vunpack.c.l.b16 %v1431
        %v1503 = vunpack.c.l.b16 %v1432
        %v1504 = vunpack.c.l.b16 %v1433
        %v1505 = vunpack.c.l.b16 %v1434
        %v1506 = vunpack.c.l.b16 %v1435
        %v1507 = vunpack.c.l.b16 %v1436
        %v1508 = vunpack.c.l.b16 %v1437
        %v1509 = vunpack.c.l.b16 %v1438
        %v1510 = vunpack.c.l.b16 %v1439
        %v1511 = vunpack.c.l.b16 %v1440
        %v1512 = vunpack.c.l.b16 %v1441
        %v1513 = vunpack.c.l.b16 %v1442
        %v1514 = vpack.c.b16 %v1483, %v1482
        %v1515 = vpack.c.b16 %v1485, %v1484
        %v1516 = vpack.c.b16 %v1487, %v1486
        %v1517 = vpack.c.b16 %v1489, %v1488
        %v1518 = vpack.c.b16 %v1491, %v1490
        %v1519 = vpack.c.b16 %v1493, %v1492
        %v1520 = vpack.c.b16 %v1495, %v1494
        %v1521 = vpack.c.b16 %v1497, %v1496
        %v1522 = vpack.c.b16 %v1499, %v1498
        %v1523 = vpack.c.b16 %v1501, %v1500
        %v1524 = vpack.c.b16 %v1503, %v1502
        %v1525 = vpack.c.b16 %v1505, %v1504
        %v1526 = vpack.c.b16 %v1507, %v1506
        %v1527 = vpack.c.b16 %v1509, %v1508
        %v1528 = vpack.c.b16 %v1511, %v1510
        %v1529 = vpack.c.b16 %v1513, %v1512
        %1546 = vmatprep.subr.bf16.mxu0 0
        %1547 = vmatpush1.bf16.msra.mxu0 %v1521
        %1548 = vmatprep.subr.bf16.mxu0 0
        %1549 = vmatpush1.bf16.msra.mxu0 %v1520
        %1550 = vmatprep.subr.bf16.mxu0 0
        %1551 = vmatpush1.bf16.msra.mxu0 %v1519
        %1552 = vmatprep.subr.bf16.mxu0 0
        %1553 = vmatpush1.bf16.msra.mxu0 %v1518
        %1554 = vmatprep.subr.bf16.mxu0 0
        %1555 = vmatpush1.bf16.msra.mxu0 %v1517
        %1556 = vmatprep.subr.bf16.mxu0 0
        %1557 = vmatpush1.bf16.msra.mxu0 %v1516
        %1558 = vmatprep.subr.bf16.mxu0 0
        %1559 = vmatpush1.bf16.msra.mxu0 %v1515
        %1560 = vmatprep.subr.bf16.mxu0 0
        %1561 = vmatpush1.bf16.msra.mxu0 %v1514
        %1562 = vmatprep.subr.bf16.mxu0 0
        %1563 = vmatpush2.bf16.msra.mxu0 %v1529
        %1564 = vmatprep.subr.bf16.mxu0 0
        %1565 = vmatpush2.bf16.msra.mxu0 %v1528
        %1566 = vmatprep.subr.bf16.mxu0 0
        %1567 = vmatpush2.bf16.msra.mxu0 %v1527
        %1568 = vmatprep.subr.bf16.mxu0 0
        %1569 = vmatpush2.bf16.msra.mxu0 %v1526
        %1570 = vmatprep.subr.bf16.mxu0 0
        %1571 = vmatpush2.bf16.msra.mxu0 %v1525
        %1572 = vmatprep.subr.bf16.mxu0 0
        %1573 = vmatpush2.bf16.msra.mxu0 %v1524
        %1574 = vmatprep.subr.bf16.mxu0 0
        %1575 = vmatpush2.bf16.msra.mxu0 %v1523
        %1576 = vmatprep.subr.bf16.mxu0 0
        %1577 = vmatpush2.bf16.msra.mxu0 %v1522
        %1578 = vmatprep.mubr.bf16.mxu0 %v1410
        %1579 = vmatmul.mubr.bf16.gmra.mxu0 %v1409
        %v1580 = vpop.f32.mrf.mxu0
        %v1581 = vadd.f32 %v1448, %v1580
        %v1582 = vpop.f32.mrf.mxu0
        %v1583 = vpop.f32.mrf.mxu0
        %v1584 = vpop.f32.mrf.mxu0
        %1585 = vdwg.mxu0
        %v1586 = vmax.f32 %v1581, 0.0
        %v1587 = vpack.c.bf16 %v1586, %v1586
        %v1588 = vld [vmem:[#allocation11] sm:$0xf]
        %v1589 = vld [vmem:[#allocation11 + $0x4] sm:$0xf]
        %v1590 = vld [vmem:[#allocation11 + $0x8] sm:$0xf]
        %v1591 = vld [vmem:[#allocation11 + $0xc] sm:$0xf]
        %v1592 = vld [vmem:[#allocation11 + $0x10] sm:$0xf]
        %v1593 = vld [vmem:[#allocation11 + $0x14] sm:$0xf]
        %v1594 = vld [vmem:[#allocation11 + $0x18] sm:$0xf]
        %v1595 = vld [vmem:[#allocation11 + $0x1c] sm:$0xf]
        %v1596 = vld [vmem:[#allocation11 + $0x20] sm:$0xf]
        %v1597 = vld [vmem:[#allocation11 + $0x24] sm:$0xf]
        %v1598 = vld [vmem:[#allocation11 + $0x28] sm:$0xf]
        %v1599 = vld [vmem:[#allocation11 + $0x2c] sm:$0xf]
        %v1600 = vld [vmem:[#allocation11 + $0x30] sm:$0xf]
        %v1601 = vld [vmem:[#allocation11 + $0x34] sm:$0xf]
        %v1602 = vld [vmem:[#allocation11 + $0x38] sm:$0xf]
        %v1603 = vld [vmem:[#allocation11 + $0x3c] sm:$0xf]
        %v1604 = vld [vmem:[%s8] sm:$0x1]
        %v1606 = vlaneseq
        %v1607 = vshrl.u32 %v1606, 7
        %v1608 = vsub.s32 0, %v1607
        %v1609 = vrot.slane %v1604, %v1608
        %v1627 = vunpack.c.l.b16 %v1588
        %v1628 = vunpack.c.l.b16 %v1589
        %v1629 = vunpack.c.l.b16 %v1590
        %v1630 = vunpack.c.l.b16 %v1591
        %v1631 = vunpack.c.l.b16 %v1592
        %v1632 = vunpack.c.l.b16 %v1593
        %v1633 = vunpack.c.l.b16 %v1594
        %v1634 = vunpack.c.l.b16 %v1595
        %v1635 = vunpack.c.l.b16 %v1596
        %v1636 = vunpack.c.l.b16 %v1597
        %v1637 = vunpack.c.l.b16 %v1598
        %v1638 = vunpack.c.l.b16 %v1599
        %v1639 = vunpack.c.l.b16 %v1600
        %v1640 = vunpack.c.l.b16 %v1601
        %v1641 = vunpack.c.l.b16 %v1602
        %v1642 = vunpack.c.l.b16 %v1603
        %v1643 = vpack.c.b16 %v1628, %v1627
        %v1644 = vpack.c.b16 %v1630, %v1629
        %v1645 = vpack.c.b16 %v1632, %v1631
        %v1646 = vpack.c.b16 %v1634, %v1633
        %v1647 = vpack.c.b16 %v1636, %v1635
        %v1648 = vpack.c.b16 %v1638, %v1637
        %v1649 = vpack.c.b16 %v1640, %v1639
        %v1650 = vpack.c.b16 %v1642, %v1641
        %1659 = vmatprep.subr.bf16.mxu0 0
        %1660 = vmatpush1.bf16.msra.mxu0 %v1650
        %1661 = vmatprep.subr.bf16.mxu0 0
        %1662 = vmatpush1.bf16.msra.mxu0 %v1649
        %1663 = vmatprep.subr.bf16.mxu0 0
        %1664 = vmatpush1.bf16.msra.mxu0 %v1648
        %1665 = vmatprep.subr.bf16.mxu0 0
        %1666 = vmatpush1.bf16.msra.mxu0 %v1647
        %1667 = vmatprep.subr.bf16.mxu0 0
        %1668 = vmatpush1.bf16.msra.mxu0 %v1646
        %1669 = vmatprep.subr.bf16.mxu0 0
        %1670 = vmatpush1.bf16.msra.mxu0 %v1645
        %1671 = vmatprep.subr.bf16.mxu0 0
        %1672 = vmatpush1.bf16.msra.mxu0 %v1644
        %1673 = vmatprep.subr.bf16.mxu0 0
        %1674 = vmatpush1.bf16.msra.mxu0 %v1643
        %1675 = vmatprep.subr.bf16.mxu0 0
        %1676 = vmatpush2.bf16.msra.mxu0 0
        %1677 = vmatprep.subr.bf16.mxu0 0
        %1678 = vmatpush2.bf16.msra.mxu0 0
        %1679 = vmatprep.subr.bf16.mxu0 0
        %1680 = vmatpush2.bf16.msra.mxu0 0
        %1681 = vmatprep.subr.bf16.mxu0 0
        %1682 = vmatpush2.bf16.msra.mxu0 0
        %1683 = vmatprep.subr.bf16.mxu0 0
        %1684 = vmatpush2.bf16.msra.mxu0 0
        %1685 = vmatprep.subr.bf16.mxu0 0
        %1686 = vmatpush2.bf16.msra.mxu0 0
        %1687 = vmatprep.subr.bf16.mxu0 0
        %1688 = vmatpush2.bf16.msra.mxu0 0
        %1689 = vmatprep.subr.bf16.mxu0 0
        %1690 = vmatpush2.bf16.msra.mxu0 0
        %1691 = vmatprep.mubr.bf16.mxu0 0
        %1692 = vmatmul.mubr.bf16.gmra.mxu0 %v1587
        %v1693 = vpop.f32.mrf.mxu0
        %v1694 = vadd.f32 %v1609, %v1693
        %v1695 = vpop.f32.mrf.mxu0
        %v1696 = vpop.f32.mrf.mxu0
        %v1697 = vpop.f32.mrf.mxu0
        %1698 = vdwg.mxu0
        %v1699 = vmax.f32 %v1694, 0.0
        %v1700 = vpack.c.bf16 %v1699, %v1699
        %v1701 = vld [vmem:[#allocation13] sm:$0xf]
        %v1702 = vld [vmem:[#allocation13 + $0x4] sm:$0xf]
        %v1703 = vld [vmem:[#allocation13 + $0x8] sm:$0xf]
        %v1704 = vld [vmem:[#allocation13 + $0xc] sm:$0xf]
        %v1705 = vld [vmem:[#allocation13 + $0x10] sm:$0xf]
        %v1706 = vld [vmem:[#allocation13 + $0x14] sm:$0xf]
        %v1707 = vld [vmem:[#allocation13 + $0x18] sm:$0xf]
        %v1708 = vld [vmem:[#allocation13 + $0x1c] sm:$0xf]
        %v1709 = vld [vmem:[#allocation13 + $0x20] sm:$0xf]
        %v1710 = vld [vmem:[#allocation13 + $0x24] sm:$0xf]
        %v1711 = vld [vmem:[#allocation13 + $0x28] sm:$0xf]
        %v1712 = vld [vmem:[#allocation13 + $0x2c] sm:$0xf]
        %v1713 = vld [vmem:[#allocation13 + $0x30] sm:$0xf]
        %v1714 = vld [vmem:[#allocation13 + $0x34] sm:$0xf]
        %v1715 = vld [vmem:[#allocation13 + $0x38] sm:$0xf]
        %v1716 = vld [vmem:[#allocation13 + $0x3c] sm:$0xf]
        %v1717 = vld [vmem:[%s10] sm:$0x1]
        %v1719 = vlaneseq
        %v1720 = vshrl.u32 %v1719, 7
        %v1721 = vsub.s32 0, %v1720
        %v1722 = vrot.slane %v1717, %v1721
        %v1740 = vunpack.c.l.b16 %v1701
        %v1741 = vunpack.c.l.b16 %v1702
        %v1742 = vunpack.c.l.b16 %v1703
        %v1743 = vunpack.c.l.b16 %v1704
        %v1744 = vunpack.c.l.b16 %v1705
        %v1745 = vunpack.c.l.b16 %v1706
        %v1746 = vunpack.c.l.b16 %v1707
        %v1747 = vunpack.c.l.b16 %v1708
        %v1748 = vunpack.c.l.b16 %v1709
        %v1749 = vunpack.c.l.b16 %v1710
        %v1750 = vunpack.c.l.b16 %v1711
        %v1751 = vunpack.c.l.b16 %v1712
        %v1752 = vunpack.c.l.b16 %v1713
        %v1753 = vunpack.c.l.b16 %v1714
        %v1754 = vunpack.c.l.b16 %v1715
        %v1755 = vunpack.c.l.b16 %v1716
        %v1756 = vpack.c.b16 %v1741, %v1740
        %v1757 = vpack.c.b16 %v1743, %v1742
        %v1758 = vpack.c.b16 %v1745, %v1744
        %v1759 = vpack.c.b16 %v1747, %v1746
        %v1760 = vpack.c.b16 %v1749, %v1748
        %v1761 = vpack.c.b16 %v1751, %v1750
        %v1762 = vpack.c.b16 %v1753, %v1752
        %v1763 = vpack.c.b16 %v1755, %v1754
        %1772 = vmatprep.subr.bf16.mxu0 0
        %1773 = vmatpush1.bf16.msra.mxu0 %v1763
        %1774 = vmatprep.subr.bf16.mxu0 0
        %1775 = vmatpush1.bf16.msra.mxu0 %v1762
        %1776 = vmatprep.subr.bf16.mxu0 0
        %1777 = vmatpush1.bf16.msra.mxu0 %v1761
        %1778 = vmatprep.subr.bf16.mxu0 0
        %1779 = vmatpush1.bf16.msra.mxu0 %v1760
        %1780 = vmatprep.subr.bf16.mxu0 0
        %1781 = vmatpush1.bf16.msra.mxu0 %v1759
        %1782 = vmatprep.subr.bf16.mxu0 0
        %1783 = vmatpush1.bf16.msra.mxu0 %v1758
        %1784 = vmatprep.subr.bf16.mxu0 0
        %1785 = vmatpush1.bf16.msra.mxu0 %v1757
        %1786 = vmatprep.subr.bf16.mxu0 0
        %1787 = vmatpush1.bf16.msra.mxu0 %v1756
        %1788 = vmatprep.subr.bf16.mxu0 0
        %1789 = vmatpush2.bf16.msra.mxu0 0
        %1790 = vmatprep.subr.bf16.mxu0 0
        %1791 = vmatpush2.bf16.msra.mxu0 0
        %1792 = vmatprep.subr.bf16.mxu0 0
        %1793 = vmatpush2.bf16.msra.mxu0 0
        %1794 = vmatprep.subr.bf16.mxu0 0
        %1795 = vmatpush2.bf16.msra.mxu0 0
        %1796 = vmatprep.subr.bf16.mxu0 0
        %1797 = vmatpush2.bf16.msra.mxu0 0
        %1798 = vmatprep.subr.bf16.mxu0 0
        %1799 = vmatpush2.bf16.msra.mxu0 0
        %1800 = vmatprep.subr.bf16.mxu0 0
        %1801 = vmatpush2.bf16.msra.mxu0 0
        %1802 = vmatprep.subr.bf16.mxu0 0
        %1803 = vmatpush2.bf16.msra.mxu0 0
        %1804 = vmatprep.mubr.bf16.mxu0 0
        %1805 = vmatmul.mubr.bf16.gmra.mxu0 %v1700
        %v1806 = vpop.f32.mrf.mxu0
        %v1807 = vadd.f32 %v1722, %v1806
        %v1808 = vpop.f32.mrf.mxu0
        %v1809 = vpop.f32.mrf.mxu0
        %v1810 = vpop.f32.mrf.mxu0
        %1811 = vdwg.mxu0
        %v1812 = vmax.f32 %v1807, 0.0
        %v1813 = vpack.c.bf16 %v1812, %v1812
        %v1814 = vld [vmem:[#allocation14] sm:$0xf]
        %v1815 = vld [vmem:[#allocation14 + $0x4] sm:$0xf]
        %v1816 = vld [vmem:[#allocation14 + $0x8] sm:$0xf]
        %v1817 = vld [vmem:[#allocation14 + $0xc] sm:$0xf]
        %v1818 = vld [vmem:[#allocation14 + $0x10] sm:$0xf]
        %v1819 = vld [vmem:[#allocation14 + $0x14] sm:$0xf]
        %v1820 = vld [vmem:[#allocation14 + $0x18] sm:$0xf]
        %v1821 = vld [vmem:[#allocation14 + $0x1c] sm:$0xf]
        %v1822 = vld [vmem:[#allocation14 + $0x20] sm:$0xf]
        %v1823 = vld [vmem:[#allocation14 + $0x24] sm:$0xf]
        %v1824 = vld [vmem:[#allocation14 + $0x28] sm:$0xf]
        %v1825 = vld [vmem:[#allocation14 + $0x2c] sm:$0xf]
        %v1826 = vld [vmem:[#allocation14 + $0x30] sm:$0xf]
        %v1827 = vld [vmem:[#allocation14 + $0x34] sm:$0xf]
        %v1828 = vld [vmem:[#allocation14 + $0x38] sm:$0xf]
        %v1829 = vld [vmem:[#allocation14 + $0x3c] sm:$0xf]
        %v1830 = vld [vmem:[%s12] sm:$0x1]
        %v1832 = vlaneseq
        %v1833 = vshrl.u32 %v1832, 7
        %v1834 = vsub.s32 0, %v1833
        %v1835 = vrot.slane %v1830, %v1834
        %v1853 = vunpack.c.l.b16 %v1814
        %v1854 = vunpack.c.l.b16 %v1815
        %v1855 = vunpack.c.l.b16 %v1816
        %v1856 = vunpack.c.l.b16 %v1817
        %v1857 = vunpack.c.l.b16 %v1818
        %v1858 = vunpack.c.l.b16 %v1819
        %v1859 = vunpack.c.l.b16 %v1820
        %v1860 = vunpack.c.l.b16 %v1821
        %v1861 = vunpack.c.l.b16 %v1822
        %v1862 = vunpack.c.l.b16 %v1823
        %v1863 = vunpack.c.l.b16 %v1824
        %v1864 = vunpack.c.l.b16 %v1825
        %v1865 = vunpack.c.l.b16 %v1826
        %v1866 = vunpack.c.l.b16 %v1827
        %v1867 = vunpack.c.l.b16 %v1828
        %v1868 = vunpack.c.l.b16 %v1829
        %v1869 = vpack.c.b16 %v1854, %v1853
        %v1870 = vpack.c.b16 %v1856, %v1855
        %v1871 = vpack.c.b16 %v1858, %v1857
        %v1872 = vpack.c.b16 %v1860, %v1859
        %v1873 = vpack.c.b16 %v1862, %v1861
        %v1874 = vpack.c.b16 %v1864, %v1863
        %v1875 = vpack.c.b16 %v1866, %v1865
        %v1876 = vpack.c.b16 %v1868, %v1867
        %1885 = vmatprep.subr.bf16.mxu0 0
        %1886 = vmatpush1.bf16.msra.mxu0 %v1876
        %1887 = vmatprep.subr.bf16.mxu0 0
        %1888 = vmatpush1.bf16.msra.mxu0 %v1875
        %1889 = vmatprep.subr.bf16.mxu0 0
        %1890 = vmatpush1.bf16.msra.mxu0 %v1874
        %1891 = vmatprep.subr.bf16.mxu0 0
        %1892 = vmatpush1.bf16.msra.mxu0 %v1873
        %1893 = vmatprep.subr.bf16.mxu0 0
        %1894 = vmatpush1.bf16.msra.mxu0 %v1872
        %1895 = vmatprep.subr.bf16.mxu0 0
        %1896 = vmatpush1.bf16.msra.mxu0 %v1871
        %1897 = vmatprep.subr.bf16.mxu0 0
        %1898 = vmatpush1.bf16.msra.mxu0 %v1870
        %1899 = vmatprep.subr.bf16.mxu0 0
        %1900 = vmatpush1.bf16.msra.mxu0 %v1869
        %1901 = vmatprep.subr.bf16.mxu0 0
        %1902 = vmatpush2.bf16.msra.mxu0 0
        %1903 = vmatprep.subr.bf16.mxu0 0
        %1904 = vmatpush2.bf16.msra.mxu0 0
        %1905 = vmatprep.subr.bf16.mxu0 0
        %1906 = vmatpush2.bf16.msra.mxu0 0
        %1907 = vmatprep.subr.bf16.mxu0 0
        %1908 = vmatpush2.bf16.msra.mxu0 0
        %1909 = vmatprep.subr.bf16.mxu0 0
        %1910 = vmatpush2.bf16.msra.mxu0 0
        %1911 = vmatprep.subr.bf16.mxu0 0
        %1912 = vmatpush2.bf16.msra.mxu0 0
        %1913 = vmatprep.subr.bf16.mxu0 0
        %1914 = vmatpush2.bf16.msra.mxu0 0
        %1915 = vmatprep.subr.bf16.mxu0 0
        %1916 = vmatpush2.bf16.msra.mxu0 0
        %1917 = vmatprep.mubr.bf16.mxu0 0
        %1918 = vmatmul.mubr.bf16.gmra.mxu0 %v1813
        %v1919 = vpop.f32.mrf.mxu0
        %v1920 = vadd.f32 %v1835, %v1919
        %v1921 = vpop.f32.mrf.mxu0
        %v1922 = vpop.f32.mrf.mxu0
        %v1923 = vpop.f32.mrf.mxu0
        %1924 = vdwg.mxu0
        %v1925 = vmax.f32 %v1920, 0.0
        %v1926 = vpack.c.bf16 %v1925, %v1925
        %v1927 = vld [vmem:[#allocation16] sm:$0xf]
        %v1928 = vld [vmem:[#allocation16 + $0x4] sm:$0xf]
        %v1929 = vld [vmem:[#allocation16 + $0x8] sm:$0xf]
        %v1930 = vld [vmem:[#allocation16 + $0xc] sm:$0xf]
        %v1931 = vld [vmem:[#allocation16 + $0x10] sm:$0xf]
        %v1932 = vld [vmem:[#allocation16 + $0x14] sm:$0xf]
        %v1933 = vld [vmem:[#allocation16 + $0x18] sm:$0xf]
        %v1934 = vld [vmem:[#allocation16 + $0x1c] sm:$0xf]
        %v1935 = vld [vmem:[#allocation16 + $0x20] sm:$0xf]
        %v1936 = vld [vmem:[#allocation16 + $0x24] sm:$0xf]
        %v1937 = vld [vmem:[#allocation16 + $0x28] sm:$0xf]
        %v1938 = vld [vmem:[#allocation16 + $0x2c] sm:$0xf]
        %v1939 = vld [vmem:[#allocation16 + $0x30] sm:$0xf]
        %v1940 = vld [vmem:[#allocation16 + $0x34] sm:$0xf]
        %v1941 = vld [vmem:[#allocation16 + $0x38] sm:$0xf]
        %v1942 = vld [vmem:[#allocation16 + $0x3c] sm:$0xf]
        %v1943 = vld [vmem:[%s14] sm:$0x1]
        %v1945 = vlaneseq
        %v1946 = vshrl.u32 %v1945, 7
        %v1947 = vsub.s32 0, %v1946
        %v1948 = vrot.slane %v1943, %v1947
        %v1966 = vunpack.c.l.b16 %v1927
        %v1967 = vunpack.c.l.b16 %v1928
        %v1968 = vunpack.c.l.b16 %v1929
        %v1969 = vunpack.c.l.b16 %v1930
        %v1970 = vunpack.c.l.b16 %v1931
        %v1971 = vunpack.c.l.b16 %v1932
        %v1972 = vunpack.c.l.b16 %v1933
        %v1973 = vunpack.c.l.b16 %v1934
        %v1974 = vunpack.c.l.b16 %v1935
        %v1975 = vunpack.c.l.b16 %v1936
        %v1976 = vunpack.c.l.b16 %v1937
        %v1977 = vunpack.c.l.b16 %v1938
        %v1978 = vunpack.c.l.b16 %v1939
        %v1979 = vunpack.c.l.b16 %v1940
        %v1980 = vunpack.c.l.b16 %v1941
        %v1981 = vunpack.c.l.b16 %v1942
        %v1982 = vpack.c.b16 %v1967, %v1966
        %v1983 = vpack.c.b16 %v1969, %v1968
        %v1984 = vpack.c.b16 %v1971, %v1970
        %v1985 = vpack.c.b16 %v1973, %v1972
        %v1986 = vpack.c.b16 %v1975, %v1974
        %v1987 = vpack.c.b16 %v1977, %v1976
        %v1988 = vpack.c.b16 %v1979, %v1978
        %v1989 = vpack.c.b16 %v1981, %v1980
        %1998 = vmatprep.subr.bf16.mxu0 0
        %1999 = vmatpush1.bf16.msra.mxu0 %v1989
        %2000 = vmatprep.subr.bf16.mxu0 0
        %2001 = vmatpush1.bf16.msra.mxu0 %v1988
        %2002 = vmatprep.subr.bf16.mxu0 0
        %2003 = vmatpush1.bf16.msra.mxu0 %v1987
        %2004 = vmatprep.subr.bf16.mxu0 0
        %2005 = vmatpush1.bf16.msra.mxu0 %v1986
        %2006 = vmatprep.subr.bf16.mxu0 0
        %2007 = vmatpush1.bf16.msra.mxu0 %v1985
        %2008 = vmatprep.subr.bf16.mxu0 0
        %2009 = vmatpush1.bf16.msra.mxu0 %v1984
        %2010 = vmatprep.subr.bf16.mxu0 0
        %2011 = vmatpush1.bf16.msra.mxu0 %v1983
        %2012 = vmatprep.subr.bf16.mxu0 0
        %2013 = vmatpush1.bf16.msra.mxu0 %v1982
        %2014 = vmatprep.subr.bf16.mxu0 0
        %2015 = vmatpush2.bf16.msra.mxu0 0
        %2016 = vmatprep.subr.bf16.mxu0 0
        %2017 = vmatpush2.bf16.msra.mxu0 0
        %2018 = vmatprep.subr.bf16.mxu0 0
        %2019 = vmatpush2.bf16.msra.mxu0 0
        %2020 = vmatprep.subr.bf16.mxu0 0
        %2021 = vmatpush2.bf16.msra.mxu0 0
        %2022 = vmatprep.subr.bf16.mxu0 0
        %2023 = vmatpush2.bf16.msra.mxu0 0
        %2024 = vmatprep.subr.bf16.mxu0 0
        %2025 = vmatpush2.bf16.msra.mxu0 0
        %2026 = vmatprep.subr.bf16.mxu0 0
        %2027 = vmatpush2.bf16.msra.mxu0 0
        %2028 = vmatprep.subr.bf16.mxu0 0
        %2029 = vmatpush2.bf16.msra.mxu0 0
        %2030 = vmatprep.mubr.bf16.mxu0 0
        %2031 = vmatmul.mubr.bf16.gmra.mxu0 %v1926
        %v2032 = vpop.f32.mrf.mxu0
        %v2033 = vadd.f32 %v1948, %v2032
        %v2034 = vpop.f32.mrf.mxu0
        %v2035 = vpop.f32.mrf.mxu0
        %v2036 = vpop.f32.mrf.mxu0
        %2037 = vdwg.mxu0
        %2038 = vxpose.xlu0.b32.start [1/16] %v2033, 128
        %2039 = vxpose.xlu0.b32.cont [2/16] 0.0, 128
        %2040 = vxpose.xlu0.b32.cont [3/16] 0.0, 128
        %2041 = vxpose.xlu0.b32.cont [4/16] 0.0, 128
        %2042 = vxpose.xlu0.b32.cont [5/16] 0.0, 128
        %2043 = vxpose.xlu0.b32.cont [6/16] 0.0, 128
        %2044 = vxpose.xlu0.b32.cont [7/16] 0.0, 128
        %2045 = vxpose.xlu0.b32.cont [8/16] 0.0, 128
        %2046 = vxpose.xlu0.b32.cont [9/16] 0.0, 128
        %2047 = vxpose.xlu0.b32.cont [10/16] 0.0, 128
        %2048 = vxpose.xlu0.b32.cont [11/16] 0.0, 128
        %2049 = vxpose.xlu0.b32.cont [12/16] 0.0, 128
        %2050 = vxpose.xlu0.b32.cont [13/16] 0.0, 128
        %2051 = vxpose.xlu0.b32.cont [14/16] 0.0, 128
        %2052 = vxpose.xlu0.b32.cont [15/16] 0.0, 128
        %2053 = vxpose.xlu0.b32.end [16/16] 0.0, 128
        %v2054 = vpop.trf.xlu0
        %v2055 = vpop.trf.xlu0
        %v2056 = vpop.trf.xlu0
        %v2057 = vpop.trf.xlu0
        %v2058 = vpop.trf.xlu0
        %v2059 = vpop.trf.xlu0
        %v2060 = vpop.trf.xlu0
        %v2061 = vpop.trf.xlu0
        %v2062 = vpop.trf.xlu0
        %v2063 = vpop.trf.xlu0
        %v2064 = vpop.trf.xlu0
        %v2065 = vpop.trf.xlu0
        %v2066 = vpop.trf.xlu0
        %v2067 = vpop.trf.xlu0
        %v2068 = vpop.trf.xlu0
        %v2069 = vpop.trf.xlu0
        %vm2070 = vcmask 57344
        %2071 = vst.msk [vmem:[%s622] sm:$0x1] %vm2070, %v2054
        %s2072 = sand.u32 %s364, 1
        %s2073 = scalar_lea.sflag [#allocation4], %s2072
        %s2074 = sand.u32 %s364, 1
        %s2075 = scalar_lea.vmem [#allocation17], %s2074
        // Predicated region
        $region117: #{tpu_custom_call.1} parent=79 // pred_check
          %p2076 = pneg %p374
        $region118: #{tpu_custom_call.1} parent=79 // pred_check_branch
          %2078 = sbr.rel (%p2076) target = $region120
        $region119: #{tpu_custom_call.1} parent=79 // pred_region
          %s2080 = ssub.s32 16, 16
          %2081 = vsyncadd %s2073, %s2080
          %s2082 = smul.addr %s36, 16
          %s2083 = scalar_lea.hbm %s15, %s2082
          %s2085 = sshll.u32 %s2075, 4
          %s2086 = int_to_ptr.vmem [resolvable:$true] %s2085
          %2088 = dma.vmem_to_hbm [thread:$0]  %s2086, 16, %s2083, %s2073
        $region120: #{tpu_custom_call.1} parent=79 // pred_fallthru
          _
      $region80: #{tpu_custom_call.1} parent=5 // pred_fallthru
        _
      %p2089 = scmp.le.s32.totalorder 2, %s31
      // Predicated region
      $region121: #{tpu_custom_call.1} parent=5 // pred_check
        %p2090 = pneg %p2089
      $region122: #{tpu_custom_call.1} parent=5 // pred_check_branch
        %2092 = sbr.rel (%p2090) target = $region124
      $region123: #{tpu_custom_call.1} parent=5 // pred_region
        %s2093 = ssub.s32 %s31, 2
        // Predicated region
        $region125: #{tpu_custom_call.1} parent=123 // pred_check
          %p2094 = pneg %p380
        $region126: #{tpu_custom_call.1} parent=123 // pred_check_branch
          %2096 = sbr.rel (%p2094) target = $region128
        $region127: #{tpu_custom_call.1} parent=123 // pred_region
          %s2097 = sand.u32 %s365, 1
          %s2098 = scalar_lea.sflag [#allocation4], %s2097
          %s2099 = sand.u32 %s365, 1
          %s2100 = scalar_lea.vmem [#allocation17], %s2099
          %2101 = dma.done %s2098, 16
        $region128: #{tpu_custom_call.1} parent=123 // pred_fallthru
          _
      $region124: #{tpu_custom_call.1} parent=5 // pred_fallthru
        _
    $region6: #{tpu_custom_call.1} parent=1 // loop_footer
      %s35 = sadd.s32 1, %s31
    $region7: #{tpu_custom_call.1} parent=1 // loop_footer_branch
      %30 = sbr.rel target = $region3
    $region8: #{tpu_custom_call.1} parent=1 // loop_exit
      _
    %2102 = vsyncpa [#allocation3], 1
    %s2103 = scalar_lea.sflag [#allocation3], 1
    %2104 = vsyncpa %s2103, 1
    %2105 = vsyncpa [#allocation6], 1
    %2106 = vsyncpa [#allocation9], 1
    %2107 = vsyncpa [#allocation12], 1
    %2108 = vsyncpa [#allocation15], 1
    %2109 = vsyncpa [#allocation4], 1
    %s2110 = scalar_lea.sflag [#allocation4], 1
    %2111 = vsyncpa %s2110, 1

</llo_original>
